<compile_context>
chip_gen: v7x
topology: tpu7x:2x2x1
jax: 0.10.0
libtpu: 0.0.40
codegen_flags: <defaults>
</compile_context>

<pallas_src>
import functools
import math

import jax
import jax.numpy as jnp
from jax.experimental import pallas as pl
from jax.experimental.pallas import tpu as pltpu

EPS = 1e-5


def _mm(x, w):
    """[N, K] @ [K, C] -> [N, C] on the MXU (f32 accumulation)."""
    return jnp.dot(x, w, preferred_element_type=jnp.float32)


# ---------------------------------------------------------------------------
# Pallas kernel
# ---------------------------------------------------------------------------
def field_evolver_kernel(field_ref,
                         w1_ref, b1_ref, g1_ref, beta1_ref,
                         w2_ref, b2_ref, g2_ref, beta2_ref,
                         w3_ref, b3_ref,
                         wr_ref, br_ref,
                         out_ref, *, time_steps, m):
    bm = field_ref.shape[0]            # B * M rows
    inv_n = 1.0 / bm                   # BatchNorm normalizer (biased variance over B*M)

    fc = field_ref[...].astype(jnp.float32)

    # --- hoisted: parameters read once, masks built once (not per time step) ---
    w1, w2, w3, wr = w1_ref[...], w2_ref[...], w3_ref[...], wr_ref[...]
    b1, g1, be1 = b1_ref[...], g1_ref[...], beta1_ref[...]
    b2, g2, be2 = b2_ref[...], g2_ref[...], beta2_ref[...]
    b3, br = b3_ref[...], br_ref[...]

    # Row masks implementing Conv1d's per-batch zero padding on the flattened [B*M, C] view:
    # rolling along axis 0 would otherwise leak across batch boundaries / wrap around.
    row = jax.lax.broadcasted_iota(jnp.int32, (bm, 1), 0) % m
    mask_prev = row != 0          # rows with m == 0   get zero for x[m-1]
    mask_next = row != (m - 1)    # rows with m == M-1 get zero for x[m+1]

    def conv_k3(x, w_stk, b):
        """Conv1d(k=3, padding=1). x: [BM, Cin], w_stk: [3*Cin, Cout] (tap k=0 pairs x[m-1])."""
        cin = x.shape[1]
        xp = jnp.where(mask_prev, pltpu.roll(x, 1, axis=0), 0.0)        # x[m-1]
        xn = jnp.where(mask_next, pltpu.roll(x, bm - 1, axis=0), 0.0)   # x[m+1]
        if cin % 128 == 0:
            # Lane-aligned concat: fused single MXU push (1 matmul instead of 3 + 2 adds).
            y = _mm(jnp.concatenate([xp, x, xn], axis=1), w_stk)
        else:
            # Narrow-channel conv (conv1): keep 3 taps, slice the stacked weight statically.
            y = (_mm(xp, w_stk[:cin]) + _mm(x, w_stk[cin:2 * cin])
                 + _mm(xn, w_stk[2 * cin:]))
        return y + b

    def bn_relu(x, gamma, beta):
        """Single-pass BatchNorm1d (training mode) fused with ReLU."""
        s = jnp.sum(x, axis=0, keepdims=True)
        ss = jnp.sum(x * x, axis=0, keepdims=True)
        mean = s * inv_n
        var = jnp.maximum(ss * inv_n - mean * mean, 0.0)
        scale = gamma * jax.lax.rsqrt(var + EPS)
        shift = beta - mean * scale
        return jnp.maximum(x * scale + shift, 0.0)

    def step(f):
        x = bn_relu(conv_k3(f, w1, b1), g1, be1)
        x = bn_relu(conv_k3(x, w2, b2), g2, be2)
        x = conv_k3(x, w3, b3)
        # residual Linear uses the field *before* the conv-branch update (matches torch order)
        f = f + (_mm(f, wr) + br)
        return f + x

    if time_steps <= 4:
        # short fixed trip count: unroll (full LLO scheduler visibility)
        for _ in range(time_steps):
            fc = step(fc)
    else:
        # long horizons: bounded live ranges / code size
        fc = jax.lax.fori_loop(0, time_steps, lambda t, f: step(f), fc)

    out_ref[...] = fc.astype(out_ref.dtype)


# ---------------------------------------------------------------------------
# Wrapper
# ---------------------------------------------------------------------------
def field_evolver_forward(field, grid_points, params, time_steps=1):
    """FieldEvolver(evolution_type='cnn').forward.  field: [B, M, D] -> [B, M, D]."""
    del grid_points  # unused by the CNN evolver (matches the PyTorch module)
    B, M, D = field.shape
    H = params["w1"].shape[2]

    # Stack conv-tap weights once: [3, Cin, Cout] -> [3*Cin, Cout]; rows [0:Cin] pair with
    # x[m-1], [Cin:2Cin] with x[m], [2Cin:3Cin] with x[m+1].
    w1s = params["w1"].reshape(3 * D, H)
    w2s = params["w2"].reshape(3 * H, H)
    w3s = params["w3"].reshape(3 * H, D)

    args = (field.reshape(B * M, D),
            w1s, params["b1"], params["g1"], params["beta1"],
            w2s, params["b2"], params["g2"], params["beta2"],
            w3s, params["b3"],
            params["wr"], params["br"])

    vmem_spec = pl.BlockSpec(memory_space=pltpu.MemorySpace.VMEM)

    out2d = pl.pallas_call(
        functools.partial(field_evolver_kernel, time_steps=time_steps, m=M),
        out_shape=jax.ShapeDtypeStruct((B * M, D), field.dtype),
        in_specs=[vmem_spec] * len(args),
        out_specs=vmem_spec,
    )(*args)
    return out2d.reshape(B, M, D)


# ---------------------------------------------------------------------------
# Pure-JAX reference (channels-last 3-D, un-fused conv taps, two-pass BN) —
# independent check of the restructured kernel math.
# ---------------------------------------------------------------------------
def _ref_mm(x, w):
    B, M, C = x.shape
    y = jnp.dot(x.reshape(B * M, C), w, preferred_element_type=jnp.float32)
    return y.reshape(B, M, w.shape[1])


def _ref_conv(x, w, b):
    z = jnp.zeros((x.shape[0], 1, x.shape[2]), x.dtype)
    xp = jnp.concatenate([z, x[:, :-1, :]], axis=1)
    xn = jnp.concatenate([x[:, 1:, :], z], axis=1)
    return _ref_mm(xp, w[0]) + _ref_mm(x, w[1]) + _ref_mm(xn, w[2]) + b.reshape(1, 1, -1)


def _ref_bn(x, gamma, beta):
    mean = jnp.mean(x, axis=(0, 1), keepdims=True)
    var = jnp.mean((x - mean) ** 2, axis=(0, 1), keepdims=True)
    xhat = (x - mean) * jax.lax.rsqrt(var + EPS)
    return xhat * gamma.reshape(1, 1, -1) + beta.reshape(1, 1, -1)


def field_evolver_reference(field, params, time_steps=1):
    fc = field.astype(jnp.float32)
    for _ in range(time_steps):
        x = jnp.maximum(_ref_bn(_ref_conv(fc, params["w1"], params["b1"]),
                                params["g1"], params["beta1"]), 0.0)
        x = jnp.maximum(_ref_bn(_ref_conv(x, params["w2"], params["b2"]),
                                params["g2"], params["beta2"]), 0.0)
        x = _ref_conv(x, params["w3"], params["b3"])
        fc = fc + (_ref_mm(fc, params["wr"]) + params["br"].reshape(1, 1, -1))
        fc = fc + x
    return fc


# ---------------------------------------------------------------------------
# Deterministic parameter init (PyTorch-default-style uniform bounds)
# ---------------------------------------------------------------------------
def init_params(key, embed_dim, hidden_dim):
    ks = jax.random.split(key, 8)

    def u(k, shape, fan_in):
        bound = 1.0 / math.sqrt(fan_in)
        return jax.random.uniform(k, shape, jnp.float32, -bound, bound)

    # Conv weights stored as [3, Cin, Cout] (torch layout [Cout, Cin, 3] rearranged).
    w1 = u(ks[0], (3, embed_dim, hidden_dim), embed_dim * 3)
    b1 = u(ks[1], (1, hidden_dim), embed_dim * 3)
    w2 = u(ks[2], (3, hidden_dim, hidden_dim), hidden_dim * 3)
    b2 = u(ks[3], (1, hidden_dim), hidden_dim * 3)
    w3 = u(ks[4], (3, hidden_dim, embed_dim), hidden_dim * 3)
    b3 = u(ks[5], (1, embed_dim), hidden_dim * 3)
    # Residual Linear(D, D): weight stored pre-transposed as [D_in, D_out].
    wr = u(ks[6], (embed_dim, embed_dim), embed_dim)
    br = u(ks[7], (1, embed_dim), embed_dim)
    # BatchNorm affine params at PyTorch defaults (gamma=1, beta=0).
    g1 = jnp.ones((1, hidden_dim), jnp.float32)
    beta1 = jnp.zeros((1, hidden_dim), jnp.float32)
    g2 = jnp.ones((1, hidden_dim), jnp.float32)
    beta2 = jnp.zeros((1, hidden_dim), jnp.float32)
    return dict(w1=w1, b1=b1, g1=g1, beta1=beta1,
                w2=w2, b2=b2, g2=g2, beta2=beta2,
                w3=w3, b3=b3, wr=wr, br=br)


if __name__ == "__main__":
    B, M, D, P = 2, 16, 8, 3          # batch, grid points, embed_dim, pos_dim
    H = 128                           # CNNFieldEvolver default hidden_dim
    TIME_STEPS = 2

    key = jax.random.PRNGKey(0)
    kf, kg, kp = jax.random.split(key, 3)
    field = jax.random.normal(kf, (B, M, D), jnp.float32)
    grid_points = jax.random.normal(kg, (B, M, P), jnp.float32)  # unused by the CNN path
    params = init_params(kp, D, H)

    out = field_evolver_forward(field, grid_points, params, time_steps=TIME_STEPS)
    out = jax.block_until_ready(out)

    ref = field_evolver_reference(field, params, time_steps=TIME_STEPS)
    assert out.shape == (B, M, D), out.shape
    assert bool(jnp.all(jnp.isfinite(out)))
    # Loose tolerance: default-precision MXU f32 matmuls use bf16 passes, and the kernel's
    # fused-tap / single-pass-BN accumulation order differs slightly from the reference.
    assert bool(jnp.allclose(out, ref, atol=2e-2, rtol=2e-2)), float(jnp.max(jnp.abs(out - ref)))

    print("KERNEL_OK")
</pallas_src>

<mosaic_0001>
module attributes {stable_mosaic.version = 11 : i64} {
  func.func @field_evolver_kernel(%arg0: memref<32x8xf32, #tpu.memory_space<vmem>>, %arg1: memref<24x128xf32, #tpu.memory_space<vmem>>, %arg2: memref<1x128xf32, #tpu.memory_space<vmem>>, %arg3: memref<1x128xf32, #tpu.memory_space<vmem>>, %arg4: memref<1x128xf32, #tpu.memory_space<vmem>>, %arg5: memref<384x128xf32, #tpu.memory_space<vmem>>, %arg6: memref<1x128xf32, #tpu.memory_space<vmem>>, %arg7: memref<1x128xf32, #tpu.memory_space<vmem>>, %arg8: memref<1x128xf32, #tpu.memory_space<vmem>>, %arg9: memref<384x8xf32, #tpu.memory_space<vmem>>, %arg10: memref<1x8xf32, #tpu.memory_space<vmem>>, %arg11: memref<8x8xf32, #tpu.memory_space<vmem>>, %arg12: memref<1x8xf32, #tpu.memory_space<vmem>>, %arg13: memref<32x8xf32, #tpu.memory_space<vmem>>) attributes {dimension_semantics = [], scalar_prefetch = 0 : i64, scratch_operands = 0 : i64, tpu.core_type = #tpu.core_type<tc>} {
    %c0 = arith.constant 0 : index
    %c0_0 = arith.constant 0 : index
    %0 = vector.load %arg0[%c0, %c0_0] : memref<32x8xf32, #tpu.memory_space<vmem>>, vector<32x8xf32>
    %c0_1 = arith.constant 0 : index
    %c0_2 = arith.constant 0 : index
    %1 = vector.load %arg1[%c0_1, %c0_2] : memref<24x128xf32, #tpu.memory_space<vmem>>, vector<24x128xf32>
    %c0_3 = arith.constant 0 : index
    %c0_4 = arith.constant 0 : index
    %2 = vector.load %arg5[%c0_3, %c0_4] : memref<384x128xf32, #tpu.memory_space<vmem>>, vector<384x128xf32>
    %c0_5 = arith.constant 0 : index
    %c0_6 = arith.constant 0 : index
    %3 = vector.load %arg9[%c0_5, %c0_6] : memref<384x8xf32, #tpu.memory_space<vmem>>, vector<384x8xf32>
    %c0_7 = arith.constant 0 : index
    %c0_8 = arith.constant 0 : index
    %4 = vector.load %arg11[%c0_7, %c0_8] : memref<8x8xf32, #tpu.memory_space<vmem>>, vector<8x8xf32>
    %c0_9 = arith.constant 0 : index
    %c0_10 = arith.constant 0 : index
    %5 = vector.load %arg2[%c0_9, %c0_10] : memref<1x128xf32, #tpu.memory_space<vmem>>, vector<1x128xf32>
    %c0_11 = arith.constant 0 : index
    %c0_12 = arith.constant 0 : index
    %6 = vector.load %arg3[%c0_11, %c0_12] : memref<1x128xf32, #tpu.memory_space<vmem>>, vector<1x128xf32>
    %c0_13 = arith.constant 0 : index
    %c0_14 = arith.constant 0 : index
    %7 = vector.load %arg4[%c0_13, %c0_14] : memref<1x128xf32, #tpu.memory_space<vmem>>, vector<1x128xf32>
    %c0_15 = arith.constant 0 : index
    %c0_16 = arith.constant 0 : index
    %8 = vector.load %arg6[%c0_15, %c0_16] : memref<1x128xf32, #tpu.memory_space<vmem>>, vector<1x128xf32>
    %c0_17 = arith.constant 0 : index
    %c0_18 = arith.constant 0 : index
    %9 = vector.load %arg7[%c0_17, %c0_18] : memref<1x128xf32, #tpu.memory_space<vmem>>, vector<1x128xf32>
    %c0_19 = arith.constant 0 : index
    %c0_20 = arith.constant 0 : index
    %10 = vector.load %arg8[%c0_19, %c0_20] : memref<1x128xf32, #tpu.memory_space<vmem>>, vector<1x128xf32>
    %c0_21 = arith.constant 0 : index
    %c0_22 = arith.constant 0 : index
    %11 = vector.load %arg10[%c0_21, %c0_22] : memref<1x8xf32, #tpu.memory_space<vmem>>, vector<1x8xf32>
    %c0_23 = arith.constant 0 : index
    %c0_24 = arith.constant 0 : index
    %12 = vector.load %arg12[%c0_23, %c0_24] : memref<1x8xf32, #tpu.memory_space<vmem>>, vector<1x8xf32>
    %13 = tpu.iota {dimensions = array<i32: 0>} : vector<32x1xi32>
    %c16_i32 = arith.constant 16 : i32
    %c0_i32 = arith.constant 0 : i32
    %14 = arith.cmpi eq, %c16_i32, %c0_i32 : i32
    %c1_i32 = arith.constant 1 : i32
    %15 = arith.select %14, %c1_i32, %c16_i32 : i32
    %16 = vector.broadcast %15 : i32 to vector<32x1xi32>
    %17 = arith.remsi %13, %16 : vector<32x1xi32>
    %c0_i32_25 = arith.constant 0 : i32
    %18 = vector.broadcast %c0_i32_25 : i32 to vector<32x1xi32>
    %19 = arith.cmpi ne, %17, %18 : vector<32x1xi32>
    %c0_i32_26 = arith.constant 0 : i32
    %20 = vector.broadcast %c0_i32_26 : i32 to vector<32x1xi32>
    %21 = arith.cmpi slt, %17, %20 : vector<32x1xi32>
    %c0_i32_27 = arith.constant 0 : i32
    %22 = arith.cmpi slt, %15, %c0_i32_27 : i32
    %23 = vector.broadcast %22 : i1 to vector<32x1xi1>
    %24 = vector.broadcast %23 : vector<32x1xi1> to vector<32x1xi1>
    %25 = arith.xori %21, %24 : vector<32x1xi1>
    %26 = arith.andi %25, %19 : vector<32x1xi1>
    %27 = vector.broadcast %15 : i32 to vector<32x1xi32>
    %28 = arith.addi %17, %27 : vector<32x1xi32>
    %29 = arith.select %26, %28, %17 : vector<32x1xi1>, vector<32x1xi32>
    %c0_i32_28 = arith.constant 0 : i32
    %30 = vector.broadcast %c0_i32_28 : i32 to vector<32x1xi32>
    %31 = arith.cmpi ne, %29, %30 : vector<32x1xi32>
    %c15_i32 = arith.constant 15 : i32
    %32 = vector.broadcast %c15_i32 : i32 to vector<32x1xi32>
    %33 = arith.cmpi ne, %29, %32 : vector<32x1xi32>
    %c1_i32_29 = arith.constant 1 : i32
    %34 = tpu.dynamic_rotate %0 by %c1_i32_29 dim 0 : vector<32x8xf32>, i32 -> vector<32x8xf32>
    %cst = arith.constant 0.000000e+00 : f32
    %35 = vector.shape_cast %31 : vector<32x1xi1> to vector<32x1xi1>
    %36 = vector.broadcast %35 : vector<32x1xi1> to vector<32x8xi1>
    %37 = vector.broadcast %cst : f32 to vector<32x8xf32>
    %38 = arith.select %36, %34, %37 : vector<32x8xi1>, vector<32x8xf32>
    %c31_i32 = arith.constant 31 : i32
    %39 = tpu.dynamic_rotate %0 by %c31_i32 dim 0 : vector<32x8xf32>, i32 -> vector<32x8xf32>
    %cst_30 = arith.constant 0.000000e+00 : f32
    %40 = vector.shape_cast %33 : vector<32x1xi1> to vector<32x1xi1>
    %41 = vector.broadcast %40 : vector<32x1xi1> to vector<32x8xi1>
    %42 = vector.broadcast %cst_30 : f32 to vector<32x8xf32>
    %43 = arith.select %41, %39, %42 : vector<32x8xi1>, vector<32x8xf32>
    %44 = vector.extract_strided_slice %1 {offsets = [0, 0], sizes = [8, 128], strides = [1, 1]} : vector<24x128xf32> to vector<8x128xf32>
    %cst_31 = arith.constant dense<0.000000e+00> : vector<32x128xf32>
    %45 = tpu.matmul %38, %44, %cst_31 {dimension_numbers = #tpu.dot_dimension_numbers<[1], [0], [0], [1], [0, 0, 1, 1], [], []>} : vector<32x8xf32>, vector<8x128xf32>, vector<32x128xf32> -> vector<32x128xf32>
    %46 = vector.extract_strided_slice %1 {offsets = [8, 0], sizes = [8, 128], strides = [1, 1]} : vector<24x128xf32> to vector<8x128xf32>
    %cst_32 = arith.constant dense<0.000000e+00> : vector<32x128xf32>
    %47 = tpu.matmul %0, %46, %cst_32 {dimension_numbers = #tpu.dot_dimension_numbers<[1], [0], [0], [1], [0, 0, 1, 1], [], []>} : vector<32x8xf32>, vector<8x128xf32>, vector<32x128xf32> -> vector<32x128xf32>
    %48 = arith.addf %45, %47 : vector<32x128xf32>
    %49 = vector.extract_strided_slice %1 {offsets = [16, 0], sizes = [8, 128], strides = [1, 1]} : vector<24x128xf32> to vector<8x128xf32>
    %cst_33 = arith.constant dense<0.000000e+00> : vector<32x128xf32>
    %50 = tpu.matmul %43, %49, %cst_33 {dimension_numbers = #tpu.dot_dimension_numbers<[1], [0], [0], [1], [0, 0, 1, 1], [], []>} : vector<32x8xf32>, vector<8x128xf32>, vector<32x128xf32> -> vector<32x128xf32>
    %51 = arith.addf %48, %50 : vector<32x128xf32>
    %52 = vector.broadcast %5 : vector<1x128xf32> to vector<32x128xf32>
    %53 = arith.addf %51, %52 : vector<32x128xf32>
    %cst_34 = arith.constant dense<0.000000e+00> : vector<128xf32>
    %54 = vector.multi_reduction <add>, %53, %cst_34 [0] : vector<32x128xf32> to vector<128xf32>
    %55 = vector.shape_cast %54 : vector<128xf32> to vector<1x128xf32>
    %56 = arith.mulf %53, %53 : vector<32x128xf32>
    %cst_35 = arith.constant dense<0.000000e+00> : vector<128xf32>
    %57 = vector.multi_reduction <add>, %56, %cst_35 [0] : vector<32x128xf32> to vector<128xf32>
    %58 = vector.shape_cast %57 : vector<128xf32> to vector<1x128xf32>
    %cst_36 = arith.constant 3.125000e-02 : f32
    %59 = vector.broadcast %cst_36 : f32 to vector<1x128xf32>
    %60 = arith.mulf %55, %59 : vector<1x128xf32>
    %cst_37 = arith.constant 3.125000e-02 : f32
    %61 = vector.broadcast %cst_37 : f32 to vector<1x128xf32>
    %62 = arith.mulf %58, %61 : vector<1x128xf32>
    %63 = arith.mulf %60, %60 : vector<1x128xf32>
    %64 = arith.subf %62, %63 : vector<1x128xf32>
    %cst_38 = arith.constant 0.000000e+00 : f32
    %65 = vector.broadcast %cst_38 : f32 to vector<1x128xf32>
    %66 = arith.maximumf %64, %65 : vector<1x128xf32>
    %cst_39 = arith.constant 9.99999974E-6 : f32
    %67 = vector.broadcast %cst_39 : f32 to vector<1x128xf32>
    %68 = arith.addf %66, %67 : vector<1x128xf32>
    %69 = math.rsqrt %68 : vector<1x128xf32>
    %70 = arith.mulf %6, %69 : vector<1x128xf32>
    %71 = arith.mulf %60, %70 : vector<1x128xf32>
    %72 = arith.subf %7, %71 : vector<1x128xf32>
    %73 = vector.broadcast %70 : vector<1x128xf32> to vector<32x128xf32>
    %74 = arith.mulf %53, %73 : vector<32x128xf32>
    %75 = vector.broadcast %72 : vector<1x128xf32> to vector<32x128xf32>
    %76 = arith.addf %74, %75 : vector<32x128xf32>
    %cst_40 = arith.constant 0.000000e+00 : f32
    %77 = vector.broadcast %cst_40 : f32 to vector<32x128xf32>
    %78 = arith.maximumf %76, %77 : vector<32x128xf32>
    %c1_i32_41 = arith.constant 1 : i32
    %79 = tpu.dynamic_rotate %78 by %c1_i32_41 dim 0 : vector<32x128xf32>, i32 -> vector<32x128xf32>
    %cst_42 = arith.constant 0.000000e+00 : f32
    %80 = vector.shape_cast %31 : vector<32x1xi1> to vector<32x1xi1>
    %81 = vector.broadcast %80 : vector<32x1xi1> to vector<32x128xi1>
    %82 = vector.broadcast %cst_42 : f32 to vector<32x128xf32>
    %83 = arith.select %81, %79, %82 : vector<32x128xi1>, vector<32x128xf32>
    %c31_i32_43 = arith.constant 31 : i32
    %84 = tpu.dynamic_rotate %78 by %c31_i32_43 dim 0 : vector<32x128xf32>, i32 -> vector<32x128xf32>
    %cst_44 = arith.constant 0.000000e+00 : f32
    %85 = vector.shape_cast %33 : vector<32x1xi1> to vector<32x1xi1>
    %86 = vector.broadcast %85 : vector<32x1xi1> to vector<32x128xi1>
    %87 = vector.broadcast %cst_44 : f32 to vector<32x128xf32>
    %88 = arith.select %86, %84, %87 : vector<32x128xi1>, vector<32x128xf32>
    %89 = tpu.concatenate %83, %78, %88 in 1 : vector<32x128xf32>, vector<32x128xf32>, vector<32x128xf32> -> vector<32x384xf32>
    %cst_45 = arith.constant dense<0.000000e+00> : vector<32x128xf32>
    %90 = tpu.matmul %89, %2, %cst_45 {dimension_numbers = #tpu.dot_dimension_numbers<[1], [0], [0], [1], [0, 0, 1, 1], [], []>} : vector<32x384xf32>, vector<384x128xf32>, vector<32x128xf32> -> vector<32x128xf32>
    %91 = vector.broadcast %8 : vector<1x128xf32> to vector<32x128xf32>
    %92 = arith.addf %90, %91 : vector<32x128xf32>
    %cst_46 = arith.constant dense<0.000000e+00> : vector<128xf32>
    %93 = vector.multi_reduction <add>, %92, %cst_46 [0] : vector<32x128xf32> to vector<128xf32>
    %94 = vector.shape_cast %93 : vector<128xf32> to vector<1x128xf32>
    %95 = arith.mulf %92, %92 : vector<32x128xf32>
    %cst_47 = arith.constant dense<0.000000e+00> : vector<128xf32>
    %96 = vector.multi_reduction <add>, %95, %cst_47 [0] : vector<32x128xf32> to vector<128xf32>
    %97 = vector.shape_cast %96 : vector<128xf32> to vector<1x128xf32>
    %cst_48 = arith.constant 3.125000e-02 : f32
    %98 = vector.broadcast %cst_48 : f32 to vector<1x128xf32>
    %99 = arith.mulf %94, %98 : vector<1x128xf32>
    %cst_49 = arith.constant 3.125000e-02 : f32
    %100 = vector.broadcast %cst_49 : f32 to vector<1x128xf32>
    %101 = arith.mulf %97, %100 : vector<1x128xf32>
    %102 = arith.mulf %99, %99 : vector<1x128xf32>
    %103 = arith.subf %101, %102 : vector<1x128xf32>
    %cst_50 = arith.constant 0.000000e+00 : f32
    %104 = vector.broadcast %cst_50 : f32 to vector<1x128xf32>
    %105 = arith.maximumf %103, %104 : vector<1x128xf32>
    %cst_51 = arith.constant 9.99999974E-6 : f32
    %106 = vector.broadcast %cst_51 : f32 to vector<1x128xf32>
    %107 = arith.addf %105, %106 : vector<1x128xf32>
    %108 = math.rsqrt %107 : vector<1x128xf32>
    %109 = arith.mulf %9, %108 : vector<1x128xf32>
    %110 = arith.mulf %99, %109 : vector<1x128xf32>
    %111 = arith.subf %10, %110 : vector<1x128xf32>
    %112 = vector.broadcast %109 : vector<1x128xf32> to vector<32x128xf32>
    %113 = arith.mulf %92, %112 : vector<32x128xf32>
    %114 = vector.broadcast %111 : vector<1x128xf32> to vector<32x128xf32>
    %115 = arith.addf %113, %114 : vector<32x128xf32>
    %cst_52 = arith.constant 0.000000e+00 : f32
    %116 = vector.broadcast %cst_52 : f32 to vector<32x128xf32>
    %117 = arith.maximumf %115, %116 : vector<32x128xf32>
    %c1_i32_53 = arith.constant 1 : i32
    %118 = tpu.dynamic_rotate %117 by %c1_i32_53 dim 0 : vector<32x128xf32>, i32 -> vector<32x128xf32>
    %cst_54 = arith.constant 0.000000e+00 : f32
    %119 = vector.shape_cast %31 : vector<32x1xi1> to vector<32x1xi1>
    %120 = vector.broadcast %119 : vector<32x1xi1> to vector<32x128xi1>
    %121 = vector.broadcast %cst_54 : f32 to vector<32x128xf32>
    %122 = arith.select %120, %118, %121 : vector<32x128xi1>, vector<32x128xf32>
    %c31_i32_55 = arith.constant 31 : i32
    %123 = tpu.dynamic_rotate %117 by %c31_i32_55 dim 0 : vector<32x128xf32>, i32 -> vector<32x128xf32>
    %cst_56 = arith.constant 0.000000e+00 : f32
    %124 = vector.shape_cast %33 : vector<32x1xi1> to vector<32x1xi1>
    %125 = vector.broadcast %124 : vector<32x1xi1> to vector<32x128xi1>
    %126 = vector.broadcast %cst_56 : f32 to vector<32x128xf32>
    %127 = arith.select %125, %123, %126 : vector<32x128xi1>, vector<32x128xf32>
    %128 = tpu.concatenate %122, %117, %127 in 1 : vector<32x128xf32>, vector<32x128xf32>, vector<32x128xf32> -> vector<32x384xf32>
    %cst_57 = arith.constant dense<0.000000e+00> : vector<32x8xf32>
    %129 = tpu.matmul %128, %3, %cst_57 {dimension_numbers = #tpu.dot_dimension_numbers<[1], [0], [0], [1], [0, 0, 1, 1], [], []>} : vector<32x384xf32>, vector<384x8xf32>, vector<32x8xf32> -> vector<32x8xf32>
    %130 = vector.broadcast %11 : vector<1x8xf32> to vector<32x8xf32>
    %131 = arith.addf %129, %130 : vector<32x8xf32>
    %cst_58 = arith.constant dense<0.000000e+00> : vector<32x8xf32>
    %132 = tpu.matmul %0, %4, %cst_58 {dimension_numbers = #tpu.dot_dimension_numbers<[1], [0], [0], [1], [0, 0, 1, 1], [], []>} : vector<32x8xf32>, vector<8x8xf32>, vector<32x8xf32> -> vector<32x8xf32>
    %133 = vector.broadcast %12 : vector<1x8xf32> to vector<32x8xf32>
    %134 = arith.addf %132, %133 : vector<32x8xf32>
    %135 = arith.addf %0, %134 : vector<32x8xf32>
    %136 = arith.addf %135, %131 : vector<32x8xf32>
    %c1_i32_59 = arith.constant 1 : i32
    %137 = tpu.dynamic_rotate %136 by %c1_i32_59 dim 0 : vector<32x8xf32>, i32 -> vector<32x8xf32>
    %cst_60 = arith.constant 0.000000e+00 : f32
    %138 = vector.shape_cast %31 : vector<32x1xi1> to vector<32x1xi1>
    %139 = vector.broadcast %138 : vector<32x1xi1> to vector<32x8xi1>
    %140 = vector.broadcast %cst_60 : f32 to vector<32x8xf32>
    %141 = arith.select %139, %137, %140 : vector<32x8xi1>, vector<32x8xf32>
    %c31_i32_61 = arith.constant 31 : i32
    %142 = tpu.dynamic_rotate %136 by %c31_i32_61 dim 0 : vector<32x8xf32>, i32 -> vector<32x8xf32>
    %cst_62 = arith.constant 0.000000e+00 : f32
    %143 = vector.shape_cast %33 : vector<32x1xi1> to vector<32x1xi1>
    %144 = vector.broadcast %143 : vector<32x1xi1> to vector<32x8xi1>
    %145 = vector.broadcast %cst_62 : f32 to vector<32x8xf32>
    %146 = arith.select %144, %142, %145 : vector<32x8xi1>, vector<32x8xf32>
    %147 = vector.extract_strided_slice %1 {offsets = [0, 0], sizes = [8, 128], strides = [1, 1]} : vector<24x128xf32> to vector<8x128xf32>
    %cst_63 = arith.constant dense<0.000000e+00> : vector<32x128xf32>
    %148 = tpu.matmul %141, %147, %cst_63 {dimension_numbers = #tpu.dot_dimension_numbers<[1], [0], [0], [1], [0, 0, 1, 1], [], []>} : vector<32x8xf32>, vector<8x128xf32>, vector<32x128xf32> -> vector<32x128xf32>
    %149 = vector.extract_strided_slice %1 {offsets = [8, 0], sizes = [8, 128], strides = [1, 1]} : vector<24x128xf32> to vector<8x128xf32>
    %cst_64 = arith.constant dense<0.000000e+00> : vector<32x128xf32>
    %150 = tpu.matmul %136, %149, %cst_64 {dimension_numbers = #tpu.dot_dimension_numbers<[1], [0], [0], [1], [0, 0, 1, 1], [], []>} : vector<32x8xf32>, vector<8x128xf32>, vector<32x128xf32> -> vector<32x128xf32>
    %151 = arith.addf %148, %150 : vector<32x128xf32>
    %152 = vector.extract_strided_slice %1 {offsets = [16, 0], sizes = [8, 128], strides = [1, 1]} : vector<24x128xf32> to vector<8x128xf32>
    %cst_65 = arith.constant dense<0.000000e+00> : vector<32x128xf32>
    %153 = tpu.matmul %146, %152, %cst_65 {dimension_numbers = #tpu.dot_dimension_numbers<[1], [0], [0], [1], [0, 0, 1, 1], [], []>} : vector<32x8xf32>, vector<8x128xf32>, vector<32x128xf32> -> vector<32x128xf32>
    %154 = arith.addf %151, %153 : vector<32x128xf32>
    %155 = vector.broadcast %5 : vector<1x128xf32> to vector<32x128xf32>
    %156 = arith.addf %154, %155 : vector<32x128xf32>
    %cst_66 = arith.constant dense<0.000000e+00> : vector<128xf32>
    %157 = vector.multi_reduction <add>, %156, %cst_66 [0] : vector<32x128xf32> to vector<128xf32>
    %158 = vector.shape_cast %157 : vector<128xf32> to vector<1x128xf32>
    %159 = arith.mulf %156, %156 : vector<32x128xf32>
    %cst_67 = arith.constant dense<0.000000e+00> : vector<128xf32>
    %160 = vector.multi_reduction <add>, %159, %cst_67 [0] : vector<32x128xf32> to vector<128xf32>
    %161 = vector.shape_cast %160 : vector<128xf32> to vector<1x128xf32>
    %cst_68 = arith.constant 3.125000e-02 : f32
    %162 = vector.broadcast %cst_68 : f32 to vector<1x128xf32>
    %163 = arith.mulf %158, %162 : vector<1x128xf32>
    %cst_69 = arith.constant 3.125000e-02 : f32
    %164 = vector.broadcast %cst_69 : f32 to vector<1x128xf32>
    %165 = arith.mulf %161, %164 : vector<1x128xf32>
    %166 = arith.mulf %163, %163 : vector<1x128xf32>
    %167 = arith.subf %165, %166 : vector<1x128xf32>
    %cst_70 = arith.constant 0.000000e+00 : f32
    %168 = vector.broadcast %cst_70 : f32 to vector<1x128xf32>
    %169 = arith.maximumf %167, %168 : vector<1x128xf32>
    %cst_71 = arith.constant 9.99999974E-6 : f32
    %170 = vector.broadcast %cst_71 : f32 to vector<1x128xf32>
    %171 = arith.addf %169, %170 : vector<1x128xf32>
    %172 = math.rsqrt %171 : vector<1x128xf32>
    %173 = arith.mulf %6, %172 : vector<1x128xf32>
    %174 = arith.mulf %163, %173 : vector<1x128xf32>
    %175 = arith.subf %7, %174 : vector<1x128xf32>
    %176 = vector.broadcast %173 : vector<1x128xf32> to vector<32x128xf32>
    %177 = arith.mulf %156, %176 : vector<32x128xf32>
    %178 = vector.broadcast %175 : vector<1x128xf32> to vector<32x128xf32>
    %179 = arith.addf %177, %178 : vector<32x128xf32>
    %cst_72 = arith.constant 0.000000e+00 : f32
    %180 = vector.broadcast %cst_72 : f32 to vector<32x128xf32>
    %181 = arith.maximumf %179, %180 : vector<32x128xf32>
    %c1_i32_73 = arith.constant 1 : i32
    %182 = tpu.dynamic_rotate %181 by %c1_i32_73 dim 0 : vector<32x128xf32>, i32 -> vector<32x128xf32>
    %cst_74 = arith.constant 0.000000e+00 : f32
    %183 = vector.shape_cast %31 : vector<32x1xi1> to vector<32x1xi1>
    %184 = vector.broadcast %183 : vector<32x1xi1> to vector<32x128xi1>
    %185 = vector.broadcast %cst_74 : f32 to vector<32x128xf32>
    %186 = arith.select %184, %182, %185 : vector<32x128xi1>, vector<32x128xf32>
    %c31_i32_75 = arith.constant 31 : i32
    %187 = tpu.dynamic_rotate %181 by %c31_i32_75 dim 0 : vector<32x128xf32>, i32 -> vector<32x128xf32>
    %cst_76 = arith.constant 0.000000e+00 : f32
    %188 = vector.shape_cast %33 : vector<32x1xi1> to vector<32x1xi1>
    %189 = vector.broadcast %188 : vector<32x1xi1> to vector<32x128xi1>
    %190 = vector.broadcast %cst_76 : f32 to vector<32x128xf32>
    %191 = arith.select %189, %187, %190 : vector<32x128xi1>, vector<32x128xf32>
    %192 = tpu.concatenate %186, %181, %191 in 1 : vector<32x128xf32>, vector<32x128xf32>, vector<32x128xf32> -> vector<32x384xf32>
    %cst_77 = arith.constant dense<0.000000e+00> : vector<32x128xf32>
    %193 = tpu.matmul %192, %2, %cst_77 {dimension_numbers = #tpu.dot_dimension_numbers<[1], [0], [0], [1], [0, 0, 1, 1], [], []>} : vector<32x384xf32>, vector<384x128xf32>, vector<32x128xf32> -> vector<32x128xf32>
    %194 = vector.broadcast %8 : vector<1x128xf32> to vector<32x128xf32>
    %195 = arith.addf %193, %194 : vector<32x128xf32>
    %cst_78 = arith.constant dense<0.000000e+00> : vector<128xf32>
    %196 = vector.multi_reduction <add>, %195, %cst_78 [0] : vector<32x128xf32> to vector<128xf32>
    %197 = vector.shape_cast %196 : vector<128xf32> to vector<1x128xf32>
    %198 = arith.mulf %195, %195 : vector<32x128xf32>
    %cst_79 = arith.constant dense<0.000000e+00> : vector<128xf32>
    %199 = vector.multi_reduction <add>, %198, %cst_79 [0] : vector<32x128xf32> to vector<128xf32>
    %200 = vector.shape_cast %199 : vector<128xf32> to vector<1x128xf32>
    %cst_80 = arith.constant 3.125000e-02 : f32
    %201 = vector.broadcast %cst_80 : f32 to vector<1x128xf32>
    %202 = arith.mulf %197, %201 : vector<1x128xf32>
    %cst_81 = arith.constant 3.125000e-02 : f32
    %203 = vector.broadcast %cst_81 : f32 to vector<1x128xf32>
    %204 = arith.mulf %200, %203 : vector<1x128xf32>
    %205 = arith.mulf %202, %202 : vector<1x128xf32>
    %206 = arith.subf %204, %205 : vector<1x128xf32>
    %cst_82 = arith.constant 0.000000e+00 : f32
    %207 = vector.broadcast %cst_82 : f32 to vector<1x128xf32>
    %208 = arith.maximumf %206, %207 : vector<1x128xf32>
    %cst_83 = arith.constant 9.99999974E-6 : f32
    %209 = vector.broadcast %cst_83 : f32 to vector<1x128xf32>
    %210 = arith.addf %208, %209 : vector<1x128xf32>
    %211 = math.rsqrt %210 : vector<1x128xf32>
    %212 = arith.mulf %9, %211 : vector<1x128xf32>
    %213 = arith.mulf %202, %212 : vector<1x128xf32>
    %214 = arith.subf %10, %213 : vector<1x128xf32>
    %215 = vector.broadcast %212 : vector<1x128xf32> to vector<32x128xf32>
    %216 = arith.mulf %195, %215 : vector<32x128xf32>
    %217 = vector.broadcast %214 : vector<1x128xf32> to vector<32x128xf32>
    %218 = arith.addf %216, %217 : vector<32x128xf32>
    %cst_84 = arith.constant 0.000000e+00 : f32
    %219 = vector.broadcast %cst_84 : f32 to vector<32x128xf32>
    %220 = arith.maximumf %218, %219 : vector<32x128xf32>
    %c1_i32_85 = arith.constant 1 : i32
    %221 = tpu.dynamic_rotate %220 by %c1_i32_85 dim 0 : vector<32x128xf32>, i32 -> vector<32x128xf32>
    %cst_86 = arith.constant 0.000000e+00 : f32
    %222 = vector.shape_cast %31 : vector<32x1xi1> to vector<32x1xi1>
    %223 = vector.broadcast %222 : vector<32x1xi1> to vector<32x128xi1>
    %224 = vector.broadcast %cst_86 : f32 to vector<32x128xf32>
    %225 = arith.select %223, %221, %224 : vector<32x128xi1>, vector<32x128xf32>
    %c31_i32_87 = arith.constant 31 : i32
    %226 = tpu.dynamic_rotate %220 by %c31_i32_87 dim 0 : vector<32x128xf32>, i32 -> vector<32x128xf32>
    %cst_88 = arith.constant 0.000000e+00 : f32
    %227 = vector.shape_cast %33 : vector<32x1xi1> to vector<32x1xi1>
    %228 = vector.broadcast %227 : vector<32x1xi1> to vector<32x128xi1>
    %229 = vector.broadcast %cst_88 : f32 to vector<32x128xf32>
    %230 = arith.select %228, %226, %229 : vector<32x128xi1>, vector<32x128xf32>
    %231 = tpu.concatenate %225, %220, %230 in 1 : vector<32x128xf32>, vector<32x128xf32>, vector<32x128xf32> -> vector<32x384xf32>
    %cst_89 = arith.constant dense<0.000000e+00> : vector<32x8xf32>
    %232 = tpu.matmul %231, %3, %cst_89 {dimension_numbers = #tpu.dot_dimension_numbers<[1], [0], [0], [1], [0, 0, 1, 1], [], []>} : vector<32x384xf32>, vector<384x8xf32>, vector<32x8xf32> -> vector<32x8xf32>
    %233 = vector.broadcast %11 : vector<1x8xf32> to vector<32x8xf32>
    %234 = arith.addf %232, %233 : vector<32x8xf32>
    %cst_90 = arith.constant dense<0.000000e+00> : vector<32x8xf32>
    %235 = tpu.matmul %136, %4, %cst_90 {dimension_numbers = #tpu.dot_dimension_numbers<[1], [0], [0], [1], [0, 0, 1, 1], [], []>} : vector<32x8xf32>, vector<8x8xf32>, vector<32x8xf32> -> vector<32x8xf32>
    %236 = vector.broadcast %12 : vector<1x8xf32> to vector<32x8xf32>
    %237 = arith.addf %235, %236 : vector<32x8xf32>
    %238 = arith.addf %136, %237 : vector<32x8xf32>
    %239 = arith.addf %238, %234 : vector<32x8xf32>
    %c0_91 = arith.constant 0 : index
    %c0_92 = arith.constant 0 : index
    %240 = vector.load %arg13[%c0_91, %c0_92] : memref<32x8xf32, #tpu.memory_space<vmem>>, vector<32x8xf32>
    tpu.vector_store %arg13[%c0_91, %c0_92], %239 {strides = array<i32>} : memref<32x8xf32, #tpu.memory_space<vmem>>, vector<32x8xf32>,
    return
  }
}

</mosaic_0001>

<llo_original>
// kernel: tpu_custom_call.1
$region0: #{tpu_custom_call.1}
  #allocation0 [shape = 'u32[]', space=smem, size = 0x4, offset = 0x4, fixed_abs, tag = 'smem constant byte address 0x4 - core index']
  #allocation1 [shape = 'u32[144,128]{1,0:T(1,128)}', space=vmem, size = 0x12000, scoped, tag = 'internal scratch']
  %s0 = inlined_call_operand.vmem [shape: f32[32,8], index: 0, kind: input, shape index: {}]
  %s1 = inlined_call_operand.vmem [shape: f32[24,128], index: 1, kind: input, shape index: {}]
  %s2 = inlined_call_operand.vmem [shape: f32[1,128], index: 2, kind: input, shape index: {}]
  %s3 = inlined_call_operand.vmem [shape: f32[1,128], index: 3, kind: input, shape index: {}]
  %s4 = inlined_call_operand.vmem [shape: f32[1,128], index: 4, kind: input, shape index: {}]
  %s5 = inlined_call_operand.vmem [shape: f32[384,128], index: 5, kind: input, shape index: {}]
  %s6 = inlined_call_operand.vmem [shape: f32[1,128], index: 6, kind: input, shape index: {}]
  %s7 = inlined_call_operand.vmem [shape: f32[1,128], index: 7, kind: input, shape index: {}]
  %s8 = inlined_call_operand.vmem [shape: f32[1,128], index: 8, kind: input, shape index: {}]
  %s9 = inlined_call_operand.vmem [shape: f32[384,8], index: 9, kind: input, shape index: {}]
  %s10 = inlined_call_operand.vmem [shape: f32[1,8], index: 10, kind: input, shape index: {}]
  %s11 = inlined_call_operand.vmem [shape: f32[8,8], index: 11, kind: input, shape index: {}]
  %s12 = inlined_call_operand.vmem [shape: f32[1,8], index: 12, kind: input, shape index: {}]
  %s13 = inlined_call_operand.vmem [shape: f32[32,8], index: 13, kind: output, shape index: {}]
  %s14 = sld [smem:[#allocation0]]
  $region62: #{tpu_custom_call.1} parent=0
    _
  %s16 = ssub.s32 1, %s14
  %s17 = scalar_select 0, %s16, %s14
  // Predicated region
  $region2: #{tpu_custom_call.1} parent=0 // pred_check
    _
  $region3: #{tpu_custom_call.1} parent=0 // pred_check_branch
    %19 = sbr.rel (0) target = $region5
  $region4: #{tpu_custom_call.1} parent=0 // pred_region
    _
  $region5: #{tpu_custom_call.1} parent=0 // pred_fallthru
    _
  // Predicated region
  $region6: #{tpu_custom_call.1} parent=0 // pred_check
    _
  $region7: #{tpu_custom_call.1} parent=0 // pred_check_branch
    %21 = sbr.rel (0) target = $region9
  $region8: #{tpu_custom_call.1} parent=0 // pred_region
    _
  $region9: #{tpu_custom_call.1} parent=0 // pred_fallthru
    _
  // Predicated region
  $region10: #{tpu_custom_call.1} parent=0 // pred_check
    _
  $region11: #{tpu_custom_call.1} parent=0 // pred_check_branch
    %23 = sbr.rel (0) target = $region13
  $region12: #{tpu_custom_call.1} parent=0 // pred_region
    _
  $region13: #{tpu_custom_call.1} parent=0 // pred_fallthru
    _
  // Predicated region
  $region14: #{tpu_custom_call.1} parent=0 // pred_check
    _
  $region15: #{tpu_custom_call.1} parent=0 // pred_check_branch
    %25 = sbr.rel (0) target = $region17
  $region16: #{tpu_custom_call.1} parent=0 // pred_region
    _
  $region17: #{tpu_custom_call.1} parent=0 // pred_fallthru
    _
  // Predicated region
  $region18: #{tpu_custom_call.1} parent=0 // pred_check
    _
  $region19: #{tpu_custom_call.1} parent=0 // pred_check_branch
    %27 = sbr.rel (0) target = $region21
  $region20: #{tpu_custom_call.1} parent=0 // pred_region
    _
  $region21: #{tpu_custom_call.1} parent=0 // pred_fallthru
    _
  // Predicated region
  $region22: #{tpu_custom_call.1} parent=0 // pred_check
    _
  $region23: #{tpu_custom_call.1} parent=0 // pred_check_branch
    %29 = sbr.rel (0) target = $region25
  $region24: #{tpu_custom_call.1} parent=0 // pred_region
    _
  $region25: #{tpu_custom_call.1} parent=0 // pred_fallthru
    _
  // Predicated region
  $region26: #{tpu_custom_call.1} parent=0 // pred_check
    _
  $region27: #{tpu_custom_call.1} parent=0 // pred_check_branch
    %31 = sbr.rel (0) target = $region29
  $region28: #{tpu_custom_call.1} parent=0 // pred_region
    _
  $region29: #{tpu_custom_call.1} parent=0 // pred_fallthru
    _
  // Predicated region
  $region30: #{tpu_custom_call.1} parent=0 // pred_check
    _
  $region31: #{tpu_custom_call.1} parent=0 // pred_check_branch
    %33 = sbr.rel (0) target = $region33
  $region32: #{tpu_custom_call.1} parent=0 // pred_region
    _
  $region33: #{tpu_custom_call.1} parent=0 // pred_fallthru
    _
  // Predicated region
  $region34: #{tpu_custom_call.1} parent=0 // pred_check
    _
  $region35: #{tpu_custom_call.1} parent=0 // pred_check_branch
    %35 = sbr.rel (0) target = $region37
  $region36: #{tpu_custom_call.1} parent=0 // pred_region
    _
  $region37: #{tpu_custom_call.1} parent=0 // pred_fallthru
    _
  // Predicated region
  $region38: #{tpu_custom_call.1} parent=0 // pred_check
    _
  $region39: #{tpu_custom_call.1} parent=0 // pred_check_branch
    %37 = sbr.rel (0) target = $region41
  $region40: #{tpu_custom_call.1} parent=0 // pred_region
    _
  $region41: #{tpu_custom_call.1} parent=0 // pred_fallthru
    _
  // Predicated region
  $region42: #{tpu_custom_call.1} parent=0 // pred_check
    _
  $region43: #{tpu_custom_call.1} parent=0 // pred_check_branch
    %39 = sbr.rel (0) target = $region45
  $region44: #{tpu_custom_call.1} parent=0 // pred_region
    _
  $region45: #{tpu_custom_call.1} parent=0 // pred_fallthru
    _
  // Predicated region
  $region46: #{tpu_custom_call.1} parent=0 // pred_check
    _
  $region47: #{tpu_custom_call.1} parent=0 // pred_check_branch
    %41 = sbr.rel (0) target = $region49
  $region48: #{tpu_custom_call.1} parent=0 // pred_region
    _
  $region49: #{tpu_custom_call.1} parent=0 // pred_fallthru
    _
  // Predicated region
  $region50: #{tpu_custom_call.1} parent=0 // pred_check
    _
  $region51: #{tpu_custom_call.1} parent=0 // pred_check_branch
    %43 = sbr.rel (0) target = $region53
  $region52: #{tpu_custom_call.1} parent=0 // pred_region
    _
  $region53: #{tpu_custom_call.1} parent=0 // pred_fallthru
    _
  %v44 = vld [vmem:[%s0] sm:$0xff]
  %v45 = vld [vmem:[%s0 + $0x8] sm:$0xff]
  %v46 = vld [vmem:[%s0 + $0x10] sm:$0xff]
  %v47 = vld [vmem:[%s0 + $0x18] sm:$0xff]
  %v48 = vld [vmem:[%s1] sm:$0xff]
  %v49 = vld [vmem:[%s1 + $0x8] sm:$0xff]
  %v50 = vld [vmem:[%s1 + $0x10] sm:$0xff]
  %v51 = vld [vmem:[%s5] sm:$0xff]
  %v52 = vld [vmem:[%s5 + $0x8] sm:$0xff]
  %v53 = vld [vmem:[%s5 + $0x10] sm:$0xff]
  %v54 = vld [vmem:[%s5 + $0x18] sm:$0xff]
  %v55 = vld [vmem:[%s5 + $0x20] sm:$0xff]
  %v56 = vld [vmem:[%s5 + $0x28] sm:$0xff]
  %v57 = vld [vmem:[%s5 + $0x30] sm:$0xff]
  %v58 = vld [vmem:[%s5 + $0x38] sm:$0xff]
  %v59 = vld [vmem:[%s5 + $0x40] sm:$0xff]
  %v60 = vld [vmem:[%s5 + $0x48] sm:$0xff]
  %v61 = vld [vmem:[%s5 + $0x50] sm:$0xff]
  %v62 = vld [vmem:[%s5 + $0x58] sm:$0xff]
  %v63 = vld [vmem:[%s5 + $0x60] sm:$0xff]
  %v64 = vld [vmem:[%s5 + $0x68] sm:$0xff]
  %v65 = vld [vmem:[%s5 + $0x70] sm:$0xff]
  %v66 = vld [vmem:[%s5 + $0x78] sm:$0xff]
  %v67 = vld [vmem:[%s5 + $0x80] sm:$0xff]
  %v68 = vld [vmem:[%s5 + $0x88] sm:$0xff]
  %v69 = vld [vmem:[%s5 + $0x90] sm:$0xff]
  %v70 = vld [vmem:[%s5 + $0x98] sm:$0xff]
  %v71 = vld [vmem:[%s5 + $0xa0] sm:$0xff]
  %v72 = vld [vmem:[%s5 + $0xa8] sm:$0xff]
  %v73 = vld [vmem:[%s5 + $0xb0] sm:$0xff]
  %v74 = vld [vmem:[%s5 + $0xb8] sm:$0xff]
  %v75 = vld [vmem:[%s5 + $0xc0] sm:$0xff]
  %v76 = vld [vmem:[%s5 + $0xc8] sm:$0xff]
  %v77 = vld [vmem:[%s5 + $0xd0] sm:$0xff]
  %v78 = vld [vmem:[%s5 + $0xd8] sm:$0xff]
  %v79 = vld [vmem:[%s5 + $0xe0] sm:$0xff]
  %v80 = vld [vmem:[%s5 + $0xe8] sm:$0xff]
  %v81 = vld [vmem:[%s5 + $0xf0] sm:$0xff]
  %v82 = vld [vmem:[%s5 + $0xf8] sm:$0xff]
  %v83 = vld [vmem:[%s5 + $0x100] sm:$0xff]
  %v84 = vld [vmem:[%s5 + $0x108] sm:$0xff]
  %v85 = vld [vmem:[%s5 + $0x110] sm:$0xff]
  %v86 = vld [vmem:[%s5 + $0x118] sm:$0xff]
  %v87 = vld [vmem:[%s5 + $0x120] sm:$0xff]
  %v88 = vld [vmem:[%s5 + $0x128] sm:$0xff]
  %v89 = vld [vmem:[%s5 + $0x130] sm:$0xff]
  %v90 = vld [vmem:[%s5 + $0x138] sm:$0xff]
  %v91 = vld [vmem:[%s5 + $0x140] sm:$0xff]
  %v92 = vld [vmem:[%s5 + $0x148] sm:$0xff]
  %v93 = vld [vmem:[%s5 + $0x150] sm:$0xff]
  %v94 = vld [vmem:[%s5 + $0x158] sm:$0xff]
  %v95 = vld [vmem:[%s5 + $0x160] sm:$0xff]
  %v96 = vld [vmem:[%s5 + $0x168] sm:$0xff]
  %v97 = vld [vmem:[%s5 + $0x170] sm:$0xff]
  %v98 = vld [vmem:[%s5 + $0x178] sm:$0xff]
  %v99 = vld [vmem:[%s9] sm:$0xff]
  %v100 = vld [vmem:[%s9 + $0x8] sm:$0xff]
  %v101 = vld [vmem:[%s9 + $0x10] sm:$0xff]
  %v102 = vld [vmem:[%s9 + $0x18] sm:$0xff]
  %v103 = vld [vmem:[%s9 + $0x20] sm:$0xff]
  %v104 = vld [vmem:[%s9 + $0x28] sm:$0xff]
  %v105 = vld [vmem:[%s9 + $0x30] sm:$0xff]
  %v106 = vld [vmem:[%s9 + $0x38] sm:$0xff]
  %v107 = vld [vmem:[%s9 + $0x40] sm:$0xff]
  %v108 = vld [vmem:[%s9 + $0x48] sm:$0xff]
  %v109 = vld [vmem:[%s9 + $0x50] sm:$0xff]
  %v110 = vld [vmem:[%s9 + $0x58] sm:$0xff]
  %v111 = vld [vmem:[%s9 + $0x60] sm:$0xff]
  %v112 = vld [vmem:[%s9 + $0x68] sm:$0xff]
  %v113 = vld [vmem:[%s9 + $0x70] sm:$0xff]
  %v114 = vld [vmem:[%s9 + $0x78] sm:$0xff]
  %v115 = vld [vmem:[%s9 + $0x80] sm:$0xff]
  %v116 = vld [vmem:[%s9 + $0x88] sm:$0xff]
  %v117 = vld [vmem:[%s9 + $0x90] sm:$0xff]
  %v118 = vld [vmem:[%s9 + $0x98] sm:$0xff]
  %v119 = vld [vmem:[%s9 + $0xa0] sm:$0xff]
  %v120 = vld [vmem:[%s9 + $0xa8] sm:$0xff]
  %v121 = vld [vmem:[%s9 + $0xb0] sm:$0xff]
  %v122 = vld [vmem:[%s9 + $0xb8] sm:$0xff]
  %v123 = vld [vmem:[%s9 + $0xc0] sm:$0xff]
  %v124 = vld [vmem:[%s9 + $0xc8] sm:$0xff]
  %v125 = vld [vmem:[%s9 + $0xd0] sm:$0xff]
  %v126 = vld [vmem:[%s9 + $0xd8] sm:$0xff]
  %v127 = vld [vmem:[%s9 + $0xe0] sm:$0xff]
  %v128 = vld [vmem:[%s9 + $0xe8] sm:$0xff]
  %v129 = vld [vmem:[%s9 + $0xf0] sm:$0xff]
  %v130 = vld [vmem:[%s9 + $0xf8] sm:$0xff]
  %v131 = vld [vmem:[%s9 + $0x100] sm:$0xff]
  %v132 = vld [vmem:[%s9 + $0x108] sm:$0xff]
  %v133 = vld [vmem:[%s9 + $0x110] sm:$0xff]
  %v134 = vld [vmem:[%s9 + $0x118] sm:$0xff]
  %v135 = vld [vmem:[%s9 + $0x120] sm:$0xff]
  %v136 = vld [vmem:[%s9 + $0x128] sm:$0xff]
  %v137 = vld [vmem:[%s9 + $0x130] sm:$0xff]
  %v138 = vld [vmem:[%s9 + $0x138] sm:$0xff]
  %v139 = vld [vmem:[%s9 + $0x140] sm:$0xff]
  %v140 = vld [vmem:[%s9 + $0x148] sm:$0xff]
  %v141 = vld [vmem:[%s9 + $0x150] sm:$0xff]
  %v142 = vld [vmem:[%s9 + $0x158] sm:$0xff]
  %v143 = vld [vmem:[%s9 + $0x160] sm:$0xff]
  %v144 = vld [vmem:[%s9 + $0x168] sm:$0xff]
  %v145 = vld [vmem:[%s9 + $0x170] sm:$0xff]
  %v146 = vld [vmem:[%s9 + $0x178] sm:$0xff]
  %v147 = vld [vmem:[%s11] sm:$0xff]
  %v148 = vld [vmem:[%s2] sm:$0x1]
  %v149 = vld [vmem:[%s3] sm:$0x1]
  %v150 = vld [vmem:[%s4] sm:$0x1]
  %v151 = vld [vmem:[%s6] sm:$0x1]
  %v152 = vld [vmem:[%s7] sm:$0x1]
  %v153 = vld [vmem:[%s8] sm:$0x1]
  %v154 = vld [vmem:[%s10] sm:$0x1]
  %v155 = vld [vmem:[%s12] sm:$0x1]
  %v156 = vlaneseq
  %v157 = vshrl.u32 %v156, 7
  %v158 = vadd.s32 %v157, 8
  %v159 = vadd.s32 %v157, 16
  %v160 = vadd.s32 %v157, 24
  %vm161 = vcmp.lt.s32.totalorder %v157, 0
  %v162 = vsub.s32 0, %v157
  %v163 = vsel %vm161, %v162, %v157
  %v164 = vshrl.u32 %v163, 4
  %v165 = vand.u32 %v163, 15
  %v166 = vsub.s32 0, %v165
  %v167 = vsel %vm161, %v166, %v165
  %vm168 = vcmp.lt.s32.totalorder %v158, 0
  %v169 = vsub.s32 0, %v158
  %v170 = vsel %vm168, %v169, %v158
  %v171 = vshrl.u32 %v170, 4
  %v172 = vand.u32 %v170, 15
  %v173 = vsub.s32 0, %v172
  %v174 = vsel %vm168, %v173, %v172
  %vm175 = vcmp.lt.s32.totalorder %v159, 0
  %v176 = vsub.s32 0, %v159
  %v177 = vsel %vm175, %v176, %v159
  %v178 = vshrl.u32 %v177, 4
  %v179 = vand.u32 %v177, 15
  %v180 = vsub.s32 0, %v179
  %v181 = vsel %vm175, %v180, %v179
  %vm182 = vcmp.lt.s32.totalorder %v160, 0
  %v183 = vsub.s32 0, %v160
  %v184 = vsel %vm182, %v183, %v160
  %v185 = vshrl.u32 %v184, 4
  %v186 = vand.u32 %v184, 15
  %v187 = vsub.s32 0, %v186
  %v188 = vsel %vm182, %v187, %v186
  %vm189 = vcmp.ne.s32.totalorder %v167, 0
  %vm190 = vcmp.ne.s32.totalorder %v174, 0
  %vm191 = vcmp.ne.s32.totalorder %v181, 0
  %vm192 = vcmp.ne.s32.totalorder %v188, 0
  %vm193 = vcmp.lt.s32.totalorder %v167, 0
  %vm194 = vcmp.lt.s32.totalorder %v174, 0
  %vm195 = vcmp.lt.s32.totalorder %v181, 0
  %vm196 = vcmp.lt.s32.totalorder %v188, 0
  %vm197 = vmand %vm193, %vm189
  %vm198 = vmand %vm194, %vm190
  %vm199 = vmand %vm195, %vm191
  %vm200 = vmand %vm196, %vm192
  %v201 = vadd.s32 %v167, 16
  %v202 = vadd.s32 %v174, 16
  %v203 = vadd.s32 %v181, 16
  %v204 = vadd.s32 %v188, 16
  %v205 = vsel %vm197, %v201, %v167
  %v206 = vsel %vm198, %v202, %v174
  %v207 = vsel %vm199, %v203, %v181
  %v208 = vsel %vm200, %v204, %v188
  %vm209 = vcmp.ne.s32.totalorder %v205, 0
  %vm210 = vcmp.ne.s32.totalorder %v206, 0
  %vm211 = vcmp.ne.s32.totalorder %v207, 0
  %vm212 = vcmp.ne.s32.totalorder %v208, 0
  %vm213 = vcmp.ne.s32.totalorder %v205, 15
  %vm214 = vcmp.ne.s32.totalorder %v206, 15
  %vm215 = vcmp.ne.s32.totalorder %v207, 15
  %vm216 = vcmp.ne.s32.totalorder %v208, 15
  %v217 = vrot.slane %v44, 7
  %v218 = vrot.slane %v45, 7
  %v219 = vrot.slane %v46, 7
  %v220 = vrot.slane %v47, 7
  %vm221 = vcmp.lt.s32.totalorder %v157, 1
  %v222 = vsel %vm221, %v219, %v220
  %v223 = vsel %vm221, %v218, %v219
  %v224 = vsel %vm221, %v217, %v218
  %v225 = vsel %vm221, %v220, %v217
  %v226 = vsel %vm209, 1, 0
  %v227 = vsel %vm210, 1, 0
  %v228 = vsel %vm211, 1, 0
  %v229 = vsel %vm212, 1, 0
  %vm230 = vcmp.eq.s32.totalorder %v226, 1
  %vm231 = vcmp.eq.s32.totalorder %v227, 1
  %vm232 = vcmp.eq.s32.totalorder %v228, 1
  %vm233 = vcmp.eq.s32.totalorder %v229, 1
  %v234 = vsel %vm230, %v225, 0.0
  %v235 = vsel %vm231, %v224, 0.0
  %v236 = vsel %vm232, %v223, 0.0
  %v237 = vsel %vm233, %v222, 0.0
  %v238 = vrot.slane %v44, 1
  %v239 = vrot.slane %v45, 1
  %v240 = vrot.slane %v46, 1
  %v241 = vrot.slane %v47, 1
  %vm242 = vcmp.lt.s32.totalorder %v157, 7
  %v243 = vsel %vm242, %v240, %v241
  %v244 = vsel %vm242, %v239, %v240
  %v245 = vsel %vm242, %v238, %v239
  %v246 = vsel %vm242, %v241, %v238
  %v247 = vsel %vm213, 1, 0
  %v248 = vsel %vm214, 1, 0
  %v249 = vsel %vm215, 1, 0
  %v250 = vsel %vm216, 1, 0
  %vm251 = vcmp.eq.s32.totalorder %v247, 1
  %vm252 = vcmp.eq.s32.totalorder %v248, 1
  %vm253 = vcmp.eq.s32.totalorder %v249, 1
  %vm254 = vcmp.eq.s32.totalorder %v250, 1
  %v255 = vsel %vm251, %v245, 0.0
  %v256 = vsel %vm252, %v244, 0.0
  %v257 = vsel %vm253, %v243, 0.0
  %v258 = vsel %vm254, %v246, 0.0
  %vm259 = vcmask 64512
  %v261 = vsel %vm259, %v44, 0
  %v264 = vsel %vm259, %v45, 0
  %v267 = vsel %vm259, %v46, 0
  %v270 = vsel %vm259, %v47, 0
  %272 = vmatprep.subr.mxu0 0.0
  %273 = vmatpush1.msra.mxu0 %v49
  %274 = vmatprep.subr.mxu0 0.0
  %275 = vmatpush1.msra.mxu0 0.0
  %276 = vmatprep.subr.mxu0 0.0
  %277 = vmatpush1.msra.mxu0 0.0
  %278 = vmatprep.subr.mxu0 0.0
  %279 = vmatpush1.msra.mxu0 0.0
  %280 = vmatprep.subr.mxu0 0.0
  %281 = vmatpush1.msra.mxu0 0.0
  %282 = vmatprep.subr.mxu0 0.0
  %283 = vmatpush1.msra.mxu0 0.0
  %284 = vmatprep.subr.mxu0 0.0
  %285 = vmatpush1.msra.mxu0 0.0
  %286 = vmatprep.subr.mxu0 0.0
  %287 = vmatpush1.msra.mxu0 0.0
  %288 = vmatprep.subr.mxu0 0.0
  %289 = vmatpush1.msra.mxu0 0.0
  %290 = vmatprep.subr.mxu0 0.0
  %291 = vmatpush1.msra.mxu0 0.0
  %292 = vmatprep.subr.mxu0 0.0
  %293 = vmatpush1.msra.mxu0 0.0
  %294 = vmatprep.subr.mxu0 0.0
  %295 = vmatpush1.msra.mxu0 0.0
  %296 = vmatprep.subr.mxu0 0.0
  %297 = vmatpush1.msra.mxu0 0.0
  %298 = vmatprep.subr.mxu0 0.0
  %299 = vmatpush1.msra.mxu0 0.0
  %300 = vmatprep.subr.mxu0 0.0
  %301 = vmatpush1.msra.mxu0 0.0
  %302 = vmatprep.subr.mxu0 0.0
  %303 = vmatpush1.msra.mxu0 0.0
  %304 = vmatprep.subr.mxu0 0.0
  %305 = vmatpush1.msra.mxu0 0.0
  %306 = vmatprep.subr.mxu0 0.0
  %307 = vmatpush1.msra.mxu0 0.0
  %308 = vmatprep.subr.mxu0 0.0
  %309 = vmatpush1.msra.mxu0 0.0
  %310 = vmatprep.subr.mxu0 0.0
  %311 = vmatpush1.msra.mxu0 0.0
  %312 = vmatprep.subr.mxu0 0.0
  %313 = vmatpush1.msra.mxu0 0.0
  %314 = vmatprep.subr.mxu0 0.0
  %315 = vmatpush1.msra.mxu0 0.0
  %316 = vmatprep.subr.mxu0 0.0
  %317 = vmatpush1.msra.mxu0 0.0
  %318 = vmatprep.subr.mxu0 0.0
  %319 = vmatpush1.msra.mxu0 0.0
  %320 = vmatprep.subr.mxu0 0.0
  %321 = vmatpush1.msra.mxu0 0.0
  %322 = vmatprep.subr.mxu0 0.0
  %323 = vmatpush1.msra.mxu0 0.0
  %324 = vmatprep.subr.mxu0 0.0
  %325 = vmatpush1.msra.mxu0 0.0
  %326 = vmatprep.subr.mxu0 0.0
  %327 = vmatpush1.msra.mxu0 0.0
  %328 = vmatprep.subr.mxu0 0.0
  %329 = vmatpush1.msra.mxu0 0.0
  %330 = vmatprep.subr.mxu0 0.0
  %331 = vmatpush1.msra.mxu0 0.0
  %332 = vmatprep.subr.mxu0 0.0
  %333 = vmatpush1.msra.mxu0 0.0
  %334 = vmatprep.subr.mxu0 0.0
  %335 = vmatpush1.msra.mxu0 0.0
  %336 = vmatprep.mubr.f32.mxu0 0.0
  %337 = vmatmul.mubr.f32.gmra.mrb[0].mxu0 %v261
  %v338 = vpop.f32.mrb[0].mxu0
  %v339 = vadd.f32 0.0, %v338
  %v340 = vpop.f32.mrb[0].mxu0
  %341 = vmatprep.mubr.f32.mxu0 0.0
  %342 = vmatmul.mubr.f32.gmra.mrb[0].mxu0 %v264
  %v343 = vpop.f32.mrb[0].mxu0
  %v344 = vadd.f32 0.0, %v343
  %v345 = vpop.f32.mrb[0].mxu0
  %346 = vmatprep.mubr.f32.mxu0 0.0
  %347 = vmatmul.mubr.f32.gmra.mrb[0].mxu0 %v267
  %v348 = vpop.f32.mrb[0].mxu0
  %v349 = vadd.f32 0.0, %v348
  %v350 = vpop.f32.mrb[0].mxu0
  %351 = vmatprep.mubr.f32.mxu0 0.0
  %352 = vmatmul.mubr.f32.gmra.mrb[0].mxu0 %v270
  %v353 = vpop.f32.mrb[0].mxu0
  %v354 = vadd.f32 0.0, %v353
  %v355 = vpop.f32.mrb[0].mxu0
  %356 = vdwg.mxu0
  %v358 = vsel %vm259, %v234, 0
  %v361 = vsel %vm259, %v235, 0
  %v364 = vsel %vm259, %v236, 0
  %v367 = vsel %vm259, %v237, 0
  %369 = vmatprep.subr.mxu0 0.0
  %370 = vmatpush1.msra.mxu0 %v48
  %371 = vmatprep.subr.mxu0 0.0
  %372 = vmatpush1.msra.mxu0 0.0
  %373 = vmatprep.subr.mxu0 0.0
  %374 = vmatpush1.msra.mxu0 0.0
  %375 = vmatprep.subr.mxu0 0.0
  %376 = vmatpush1.msra.mxu0 0.0
  %377 = vmatprep.subr.mxu0 0.0
  %378 = vmatpush1.msra.mxu0 0.0
  %379 = vmatprep.subr.mxu0 0.0
  %380 = vmatpush1.msra.mxu0 0.0
  %381 = vmatprep.subr.mxu0 0.0
  %382 = vmatpush1.msra.mxu0 0.0
  %383 = vmatprep.subr.mxu0 0.0
  %384 = vmatpush1.msra.mxu0 0.0
  %385 = vmatprep.subr.mxu0 0.0
  %386 = vmatpush1.msra.mxu0 0.0
  %387 = vmatprep.subr.mxu0 0.0
  %388 = vmatpush1.msra.mxu0 0.0
  %389 = vmatprep.subr.mxu0 0.0
  %390 = vmatpush1.msra.mxu0 0.0
  %391 = vmatprep.subr.mxu0 0.0
  %392 = vmatpush1.msra.mxu0 0.0
  %393 = vmatprep.subr.mxu0 0.0
  %394 = vmatpush1.msra.mxu0 0.0
  %395 = vmatprep.subr.mxu0 0.0
  %396 = vmatpush1.msra.mxu0 0.0
  %397 = vmatprep.subr.mxu0 0.0
  %398 = vmatpush1.msra.mxu0 0.0
  %399 = vmatprep.subr.mxu0 0.0
  %400 = vmatpush1.msra.mxu0 0.0
  %401 = vmatprep.subr.mxu0 0.0
  %402 = vmatpush1.msra.mxu0 0.0
  %403 = vmatprep.subr.mxu0 0.0
  %404 = vmatpush1.msra.mxu0 0.0
  %405 = vmatprep.subr.mxu0 0.0
  %406 = vmatpush1.msra.mxu0 0.0
  %407 = vmatprep.subr.mxu0 0.0
  %408 = vmatpush1.msra.mxu0 0.0
  %409 = vmatprep.subr.mxu0 0.0
  %410 = vmatpush1.msra.mxu0 0.0
  %411 = vmatprep.subr.mxu0 0.0
  %412 = vmatpush1.msra.mxu0 0.0
  %413 = vmatprep.subr.mxu0 0.0
  %414 = vmatpush1.msra.mxu0 0.0
  %415 = vmatprep.subr.mxu0 0.0
  %416 = vmatpush1.msra.mxu0 0.0
  %417 = vmatprep.subr.mxu0 0.0
  %418 = vmatpush1.msra.mxu0 0.0
  %419 = vmatprep.subr.mxu0 0.0
  %420 = vmatpush1.msra.mxu0 0.0
  %421 = vmatprep.subr.mxu0 0.0
  %422 = vmatpush1.msra.mxu0 0.0
  %423 = vmatprep.subr.mxu0 0.0
  %424 = vmatpush1.msra.mxu0 0.0
  %425 = vmatprep.subr.mxu0 0.0
  %426 = vmatpush1.msra.mxu0 0.0
  %427 = vmatprep.subr.mxu0 0.0
  %428 = vmatpush1.msra.mxu0 0.0
  %429 = vmatprep.subr.mxu0 0.0
  %430 = vmatpush1.msra.mxu0 0.0
  %431 = vmatprep.subr.mxu0 0.0
  %432 = vmatpush1.msra.mxu0 0.0
  %433 = vmatprep.mubr.f32.mxu0 0.0
  %434 = vmatmul.mubr.f32.gmra.mrb[0].mxu0 %v358
  %v435 = vpop.f32.mrb[0].mxu0
  %v436 = vadd.f32 %v339, %v435
  %v437 = vpop.f32.mrb[0].mxu0
  %438 = vmatprep.mubr.f32.mxu0 0.0
  %439 = vmatmul.mubr.f32.gmra.mrb[0].mxu0 %v361
  %v440 = vpop.f32.mrb[0].mxu0
  %v441 = vadd.f32 %v344, %v440
  %v442 = vpop.f32.mrb[0].mxu0
  %443 = vmatprep.mubr.f32.mxu0 0.0
  %444 = vmatmul.mubr.f32.gmra.mrb[0].mxu0 %v364
  %v445 = vpop.f32.mrb[0].mxu0
  %v446 = vadd.f32 %v349, %v445
  %v447 = vpop.f32.mrb[0].mxu0
  %448 = vmatprep.mubr.f32.mxu0 0.0
  %449 = vmatmul.mubr.f32.gmra.mrb[0].mxu0 %v367
  %v450 = vpop.f32.mrb[0].mxu0
  %v451 = vadd.f32 %v354, %v450
  %v452 = vpop.f32.mrb[0].mxu0
  %453 = vdwg.mxu0
  %v455 = vsel %vm259, %v255, 0
  %v458 = vsel %vm259, %v256, 0
  %v461 = vsel %vm259, %v257, 0
  %v464 = vsel %vm259, %v258, 0
  %466 = vmatprep.subr.mxu0 0.0
  %467 = vmatpush1.msra.mxu0 %v50
  %468 = vmatprep.subr.mxu0 0.0
  %469 = vmatpush1.msra.mxu0 0.0
  %470 = vmatprep.subr.mxu0 0.0
  %471 = vmatpush1.msra.mxu0 0.0
  %472 = vmatprep.subr.mxu0 0.0
  %473 = vmatpush1.msra.mxu0 0.0
  %474 = vmatprep.subr.mxu0 0.0
  %475 = vmatpush1.msra.mxu0 0.0
  %476 = vmatprep.subr.mxu0 0.0
  %477 = vmatpush1.msra.mxu0 0.0
  %478 = vmatprep.subr.mxu0 0.0
  %479 = vmatpush1.msra.mxu0 0.0
  %480 = vmatprep.subr.mxu0 0.0
  %481 = vmatpush1.msra.mxu0 0.0
  %482 = vmatprep.subr.mxu0 0.0
  %483 = vmatpush1.msra.mxu0 0.0
  %484 = vmatprep.subr.mxu0 0.0
  %485 = vmatpush1.msra.mxu0 0.0
  %486 = vmatprep.subr.mxu0 0.0
  %487 = vmatpush1.msra.mxu0 0.0
  %488 = vmatprep.subr.mxu0 0.0
  %489 = vmatpush1.msra.mxu0 0.0
  %490 = vmatprep.subr.mxu0 0.0
  %491 = vmatpush1.msra.mxu0 0.0
  %492 = vmatprep.subr.mxu0 0.0
  %493 = vmatpush1.msra.mxu0 0.0
  %494 = vmatprep.subr.mxu0 0.0
  %495 = vmatpush1.msra.mxu0 0.0
  %496 = vmatprep.subr.mxu0 0.0
  %497 = vmatpush1.msra.mxu0 0.0
  %498 = vmatprep.subr.mxu0 0.0
  %499 = vmatpush1.msra.mxu0 0.0
  %500 = vmatprep.subr.mxu0 0.0
  %501 = vmatpush1.msra.mxu0 0.0
  %502 = vmatprep.subr.mxu0 0.0
  %503 = vmatpush1.msra.mxu0 0.0
  %504 = vmatprep.subr.mxu0 0.0
  %505 = vmatpush1.msra.mxu0 0.0
  %506 = vmatprep.subr.mxu0 0.0
  %507 = vmatpush1.msra.mxu0 0.0
  %508 = vmatprep.subr.mxu0 0.0
  %509 = vmatpush1.msra.mxu0 0.0
  %510 = vmatprep.subr.mxu0 0.0
  %511 = vmatpush1.msra.mxu0 0.0
  %512 = vmatprep.subr.mxu0 0.0
  %513 = vmatpush1.msra.mxu0 0.0
  %514 = vmatprep.subr.mxu0 0.0
  %515 = vmatpush1.msra.mxu0 0.0
  %516 = vmatprep.subr.mxu0 0.0
  %517 = vmatpush1.msra.mxu0 0.0
  %518 = vmatprep.subr.mxu0 0.0
  %519 = vmatpush1.msra.mxu0 0.0
  %520 = vmatprep.subr.mxu0 0.0
  %521 = vmatpush1.msra.mxu0 0.0
  %522 = vmatprep.subr.mxu0 0.0
  %523 = vmatpush1.msra.mxu0 0.0
  %524 = vmatprep.subr.mxu0 0.0
  %525 = vmatpush1.msra.mxu0 0.0
  %526 = vmatprep.subr.mxu0 0.0
  %527 = vmatpush1.msra.mxu0 0.0
  %528 = vmatprep.subr.mxu0 0.0
  %529 = vmatpush1.msra.mxu0 0.0
  %530 = vmatprep.mubr.f32.mxu0 0.0
  %531 = vmatmul.mubr.f32.gmra.mrb[0].mxu0 %v455
  %v532 = vpop.f32.mrb[0].mxu0
  %v533 = vadd.f32 0.0, %v532
  %v534 = vpop.f32.mrb[0].mxu0
  %535 = vmatprep.mubr.f32.mxu0 0.0
  %536 = vmatmul.mubr.f32.gmra.mrb[0].mxu0 %v458
  %v537 = vpop.f32.mrb[0].mxu0
  %v538 = vadd.f32 0.0, %v537
  %v539 = vpop.f32.mrb[0].mxu0
  %540 = vmatprep.mubr.f32.mxu0 0.0
  %541 = vmatmul.mubr.f32.gmra.mrb[0].mxu0 %v461
  %v542 = vpop.f32.mrb[0].mxu0
  %v543 = vadd.f32 0.0, %v542
  %v544 = vpop.f32.mrb[0].mxu0
  %545 = vmatprep.mubr.f32.mxu0 0.0
  %546 = vmatmul.mubr.f32.gmra.mrb[0].mxu0 %v464
  %v547 = vpop.f32.mrb[0].mxu0
  %v548 = vadd.f32 0.0, %v547
  %v549 = vpop.f32.mrb[0].mxu0
  %550 = vdwg.mxu0
  %v551 = vadd.f32 %v436, %v533
  %v552 = vadd.f32 %v441, %v538
  %v553 = vadd.f32 %v446, %v543
  %v554 = vadd.f32 %v451, %v548
  %v556 = vlaneseq
  %v557 = vshrl.u32 %v556, 7
  %v558 = vsub.s32 0, %v557
  %v559 = vrot.slane %v148, %v558
  %v561 = vadd.f32 %v551, %v559
  %v562 = vadd.f32 %v552, %v559
  %v563 = vadd.f32 %v553, %v559
  %v564 = vadd.f32 %v554, %v559
  %v565 = vadd.f32 %v561, %v562
  %v566 = vadd.f32 %v565, %v563
  %v567 = vadd.f32 %v566, %v564
  %v568 = vrot.slane %v567, 4
  %v569 = vadd.f32 %v567, %v568
  %v570 = vrot.slane %v569, 2
  %v571 = vadd.f32 %v569, %v570
  %v572 = vrot.slane %v571, 1
  %v573 = vadd.f32 %v571, %v572
  %v574 = vmul.f32 %v561, %v561
  %v575 = vmul.f32 %v562, %v562
  %v576 = vmul.f32 %v563, %v563
  %v577 = vmul.f32 %v564, %v564
  %v578 = vadd.f32 %v574, %v575
  %v579 = vadd.f32 %v578, %v576
  %v580 = vadd.f32 %v579, %v577
  %v581 = vrot.slane %v580, 4
  %v582 = vadd.f32 %v580, %v581
  %v583 = vrot.slane %v582, 2
  %v584 = vadd.f32 %v582, %v583
  %v585 = vrot.slane %v584, 1
  %v586 = vadd.f32 %v584, %v585
  %v587 = vmul.f32 %v573, 0.03125
  %v588 = vmul.f32 %v586, 0.03125
  %v589 = vmul.f32 %v587, %v587
  %v590 = vsub.f32 %v588, %v589
  %v591 = vmax.f32 %v590, 0.0
  %v592 = vadd.f32 %v591, 1e-05
  %v593 = vrsqrt.pop %v592
  %v594 = vmul.f32 %v149, %v593
  %v595 = vmul.f32 %v587, %v594
  %v596 = vsub.f32 %v150, %v595
  %v598 = vlaneseq
  %v599 = vshrl.u32 %v598, 7
  %v600 = vsub.s32 0, %v599
  %v601 = vrot.slane %v594, %v600
  %v603 = vmul.f32 %v561, %v601
  %v604 = vmul.f32 %v562, %v601
  %v605 = vmul.f32 %v563, %v601
  %v606 = vmul.f32 %v564, %v601
  %v608 = vlaneseq
  %v609 = vshrl.u32 %v608, 7
  %v610 = vsub.s32 0, %v609
  %v611 = vrot.slane %v596, %v610
  %v613 = vadd.f32 %v603, %v611
  %v614 = vadd.f32 %v604, %v611
  %v615 = vadd.f32 %v605, %v611
  %v616 = vadd.f32 %v606, %v611
  %v617 = vmax.f32 %v613, 0.0
  %v618 = vmax.f32 %v614, 0.0
  %v619 = vmax.f32 %v615, 0.0
  %v620 = vmax.f32 %v616, 0.0
  %v621 = vrot.slane %v617, 7
  %v622 = vrot.slane %v618, 7
  %v623 = vrot.slane %v619, 7
  %v624 = vrot.slane %v620, 7
  %v625 = vsel %vm221, %v623, %v624
  %v626 = vsel %vm221, %v622, %v623
  %v627 = vsel %vm221, %v621, %v622
  %v628 = vsel %vm221, %v624, %v621
  %v629 = vsel %vm230, %v628, 0.0
  %v630 = vsel %vm231, %v627, 0.0
  %v631 = vsel %vm232, %v626, 0.0
  %v632 = vsel %vm233, %v625, 0.0
  %v633 = vrot.slane %v617, 1
  %v634 = vrot.slane %v618, 1
  %v635 = vrot.slane %v619, 1
  %v636 = vrot.slane %v620, 1
  %v637 = vsel %vm242, %v635, %v636
  %v638 = vsel %vm242, %v634, %v635
  %v639 = vsel %vm242, %v633, %v634
  %v640 = vsel %vm242, %v636, %v633
  %v641 = vsel %vm251, %v639, 0.0
  %v642 = vsel %vm252, %v638, 0.0
  %v643 = vsel %vm253, %v637, 0.0
  %v644 = vsel %vm254, %v640, 0.0
  %v646 = vlaneseq
  %v647 = vshrl.u32 %v646, 7
  %v648 = vsub.s32 0, %v647
  %v649 = vrot.slane %v151, %v648
  %651 = vmatprep.subr.mxu0 0.0
  %652 = vmatpush1.msra.mxu0 %v51
  %653 = vmatprep.subr.mxu0 0.0
  %654 = vmatpush1.msra.mxu0 %v52
  %655 = vmatprep.subr.mxu0 0.0
  %656 = vmatpush1.msra.mxu0 %v53
  %657 = vmatprep.subr.mxu0 0.0
  %658 = vmatpush1.msra.mxu0 %v54
  %659 = vmatprep.subr.mxu0 0.0
  %660 = vmatpush1.msra.mxu0 %v55
  %661 = vmatprep.subr.mxu0 0.0
  %662 = vmatpush1.msra.mxu0 %v56
  %663 = vmatprep.subr.mxu0 0.0
  %664 = vmatpush1.msra.mxu0 %v57
  %665 = vmatprep.subr.mxu0 0.0
  %666 = vmatpush1.msra.mxu0 %v58
  %667 = vmatprep.subr.mxu0 0.0
  %668 = vmatpush1.msra.mxu0 %v59
  %669 = vmatprep.subr.mxu0 0.0
  %670 = vmatpush1.msra.mxu0 %v60
  %671 = vmatprep.subr.mxu0 0.0
  %672 = vmatpush1.msra.mxu0 %v61
  %673 = vmatprep.subr.mxu0 0.0
  %674 = vmatpush1.msra.mxu0 %v62
  %675 = vmatprep.subr.mxu0 0.0
  %676 = vmatpush1.msra.mxu0 %v63
  %677 = vmatprep.subr.mxu0 0.0
  %678 = vmatpush1.msra.mxu0 %v64
  %679 = vmatprep.subr.mxu0 0.0
  %680 = vmatpush1.msra.mxu0 %v65
  %681 = vmatprep.subr.mxu0 0.0
  %682 = vmatpush1.msra.mxu0 %v66
  %683 = vmatprep.subr.mxu0 0.0
  %684 = vmatpush1.msra.mxu0 %v67
  %685 = vmatprep.subr.mxu0 0.0
  %686 = vmatpush1.msra.mxu0 %v68
  %687 = vmatprep.subr.mxu0 0.0
  %688 = vmatpush1.msra.mxu0 %v69
  %689 = vmatprep.subr.mxu0 0.0
  %690 = vmatpush1.msra.mxu0 %v70
  %691 = vmatprep.subr.mxu0 0.0
  %692 = vmatpush1.msra.mxu0 %v71
  %693 = vmatprep.subr.mxu0 0.0
  %694 = vmatpush1.msra.mxu0 %v72
  %695 = vmatprep.subr.mxu0 0.0
  %696 = vmatpush1.msra.mxu0 %v73
  %697 = vmatprep.subr.mxu0 0.0
  %698 = vmatpush1.msra.mxu0 %v74
  %699 = vmatprep.subr.mxu0 0.0
  %700 = vmatpush1.msra.mxu0 %v75
  %701 = vmatprep.subr.mxu0 0.0
  %702 = vmatpush1.msra.mxu0 %v76
  %703 = vmatprep.subr.mxu0 0.0
  %704 = vmatpush1.msra.mxu0 %v77
  %705 = vmatprep.subr.mxu0 0.0
  %706 = vmatpush1.msra.mxu0 %v78
  %707 = vmatprep.subr.mxu0 0.0
  %708 = vmatpush1.msra.mxu0 %v79
  %709 = vmatprep.subr.mxu0 0.0
  %710 = vmatpush1.msra.mxu0 %v80
  %711 = vmatprep.subr.mxu0 0.0
  %712 = vmatpush1.msra.mxu0 %v81
  %713 = vmatprep.subr.mxu0 0.0
  %714 = vmatpush1.msra.mxu0 %v82
  %715 = vmatprep.mubr.f32.mxu0 %v617
  %716 = vmatmul.mubr.f32.gmra.mrb[0].mxu0 %v629
  %v717 = vpop.f32.mrb[0].mxu0
  %v718 = vadd.f32 %v649, %v717
  %v719 = vpop.f32.mrb[0].mxu0
  %720 = vmatprep.mubr.f32.mxu0 %v618
  %721 = vmatmul.mubr.f32.gmra.mrb[0].mxu0 %v630
  %v722 = vpop.f32.mrb[0].mxu0
  %v723 = vadd.f32 %v649, %v722
  %v724 = vpop.f32.mrb[0].mxu0
  %725 = vmatprep.mubr.f32.mxu0 %v619
  %726 = vmatmul.mubr.f32.gmra.mrb[0].mxu0 %v631
  %v727 = vpop.f32.mrb[0].mxu0
  %v728 = vadd.f32 %v649, %v727
  %v729 = vpop.f32.mrb[0].mxu0
  %730 = vmatprep.mubr.f32.mxu0 %v620
  %731 = vmatmul.mubr.f32.gmra.mrb[0].mxu0 %v632
  %v732 = vpop.f32.mrb[0].mxu0
  %v733 = vadd.f32 %v649, %v732
  %v734 = vpop.f32.mrb[0].mxu0
  %735 = vdwg.mxu0
  %736 = vmatprep.subr.mxu0 0.0
  %737 = vmatpush1.msra.mxu0 %v83
  %738 = vmatprep.subr.mxu0 0.0
  %739 = vmatpush1.msra.mxu0 %v84
  %740 = vmatprep.subr.mxu0 0.0
  %741 = vmatpush1.msra.mxu0 %v85
  %742 = vmatprep.subr.mxu0 0.0
  %743 = vmatpush1.msra.mxu0 %v86
  %744 = vmatprep.subr.mxu0 0.0
  %745 = vmatpush1.msra.mxu0 %v87
  %746 = vmatprep.subr.mxu0 0.0
  %747 = vmatpush1.msra.mxu0 %v88
  %748 = vmatprep.subr.mxu0 0.0
  %749 = vmatpush1.msra.mxu0 %v89
  %750 = vmatprep.subr.mxu0 0.0
  %751 = vmatpush1.msra.mxu0 %v90
  %752 = vmatprep.subr.mxu0 0.0
  %753 = vmatpush1.msra.mxu0 %v91
  %754 = vmatprep.subr.mxu0 0.0
  %755 = vmatpush1.msra.mxu0 %v92
  %756 = vmatprep.subr.mxu0 0.0
  %757 = vmatpush1.msra.mxu0 %v93
  %758 = vmatprep.subr.mxu0 0.0
  %759 = vmatpush1.msra.mxu0 %v94
  %760 = vmatprep.subr.mxu0 0.0
  %761 = vmatpush1.msra.mxu0 %v95
  %762 = vmatprep.subr.mxu0 0.0
  %763 = vmatpush1.msra.mxu0 %v96
  %764 = vmatprep.subr.mxu0 0.0
  %765 = vmatpush1.msra.mxu0 %v97
  %766 = vmatprep.subr.mxu0 0.0
  %767 = vmatpush1.msra.mxu0 %v98
  %768 = vmatprep.subr.mxu0 0.0
  %769 = vmatpush1.msra.mxu0 0.0
  %770 = vmatprep.subr.mxu0 0.0
  %771 = vmatpush1.msra.mxu0 0.0
  %772 = vmatprep.subr.mxu0 0.0
  %773 = vmatpush1.msra.mxu0 0.0
  %774 = vmatprep.subr.mxu0 0.0
  %775 = vmatpush1.msra.mxu0 0.0
  %776 = vmatprep.subr.mxu0 0.0
  %777 = vmatpush1.msra.mxu0 0.0
  %778 = vmatprep.subr.mxu0 0.0
  %779 = vmatpush1.msra.mxu0 0.0
  %780 = vmatprep.subr.mxu0 0.0
  %781 = vmatpush1.msra.mxu0 0.0
  %782 = vmatprep.subr.mxu0 0.0
  %783 = vmatpush1.msra.mxu0 0.0
  %784 = vmatprep.subr.mxu0 0.0
  %785 = vmatpush1.msra.mxu0 0.0
  %786 = vmatprep.subr.mxu0 0.0
  %787 = vmatpush1.msra.mxu0 0.0
  %788 = vmatprep.subr.mxu0 0.0
  %789 = vmatpush1.msra.mxu0 0.0
  %790 = vmatprep.subr.mxu0 0.0
  %791 = vmatpush1.msra.mxu0 0.0
  %792 = vmatprep.subr.mxu0 0.0
  %793 = vmatpush1.msra.mxu0 0.0
  %794 = vmatprep.subr.mxu0 0.0
  %795 = vmatpush1.msra.mxu0 0.0
  %796 = vmatprep.subr.mxu0 0.0
  %797 = vmatpush1.msra.mxu0 0.0
  %798 = vmatprep.subr.mxu0 0.0
  %799 = vmatpush1.msra.mxu0 0.0
  %800 = vmatprep.mubr.f32.mxu0 0.0
  %801 = vmatmul.mubr.f32.gmra.mrb[0].mxu0 %v641
  %v802 = vpop.f32.mrb[0].mxu0
  %v803 = vadd.f32 %v718, %v802
  %v804 = vpop.f32.mrb[0].mxu0
  %805 = vmatprep.mubr.f32.mxu0 0.0
  %806 = vmatmul.mubr.f32.gmra.mrb[0].mxu0 %v642
  %v807 = vpop.f32.mrb[0].mxu0
  %v808 = vadd.f32 %v723, %v807
  %v809 = vpop.f32.mrb[0].mxu0
  %810 = vmatprep.mubr.f32.mxu0 0.0
  %811 = vmatmul.mubr.f32.gmra.mrb[0].mxu0 %v643
  %v812 = vpop.f32.mrb[0].mxu0
  %v813 = vadd.f32 %v728, %v812
  %v814 = vpop.f32.mrb[0].mxu0
  %815 = vmatprep.mubr.f32.mxu0 0.0
  %816 = vmatmul.mubr.f32.gmra.mrb[0].mxu0 %v644
  %v817 = vpop.f32.mrb[0].mxu0
  %v818 = vadd.f32 %v733, %v817
  %v819 = vpop.f32.mrb[0].mxu0
  %820 = vdwg.mxu0
  %v821 = vadd.f32 %v803, %v808
  %v822 = vadd.f32 %v821, %v813
  %v823 = vadd.f32 %v822, %v818
  %v824 = vrot.slane %v823, 4
  %v825 = vadd.f32 %v823, %v824
  %v826 = vrot.slane %v825, 2
  %v827 = vadd.f32 %v825, %v826
  %v828 = vrot.slane %v827, 1
  %v829 = vadd.f32 %v827, %v828
  %v830 = vmul.f32 %v803, %v803
  %v831 = vmul.f32 %v808, %v808
  %v832 = vmul.f32 %v813, %v813
  %v833 = vmul.f32 %v818, %v818
  %v834 = vadd.f32 %v830, %v831
  %v835 = vadd.f32 %v834, %v832
  %v836 = vadd.f32 %v835, %v833
  %v837 = vrot.slane %v836, 4
  %v838 = vadd.f32 %v836, %v837
  %v839 = vrot.slane %v838, 2
  %v840 = vadd.f32 %v838, %v839
  %v841 = vrot.slane %v840, 1
  %v842 = vadd.f32 %v840, %v841
  %v843 = vmul.f32 %v829, 0.03125
  %v844 = vmul.f32 %v842, 0.03125
  %v845 = vmul.f32 %v843, %v843
  %v846 = vsub.f32 %v844, %v845
  %v847 = vmax.f32 %v846, 0.0
  %v848 = vadd.f32 %v847, 1e-05
  %v849 = vrsqrt.pop %v848
  %v850 = vmul.f32 %v152, %v849
  %v851 = vmul.f32 %v843, %v850
  %v852 = vsub.f32 %v153, %v851
  %v854 = vlaneseq
  %v855 = vshrl.u32 %v854, 7
  %v856 = vsub.s32 0, %v855
  %v857 = vrot.slane %v850, %v856
  %v859 = vmul.f32 %v803, %v857
  %v860 = vmul.f32 %v808, %v857
  %v861 = vmul.f32 %v813, %v857
  %v862 = vmul.f32 %v818, %v857
  %v864 = vlaneseq
  %v865 = vshrl.u32 %v864, 7
  %v866 = vsub.s32 0, %v865
  %v867 = vrot.slane %v852, %v866
  %v869 = vadd.f32 %v859, %v867
  %v870 = vadd.f32 %v860, %v867
  %v871 = vadd.f32 %v861, %v867
  %v872 = vadd.f32 %v862, %v867
  %v873 = vmax.f32 %v869, 0.0
  %v874 = vmax.f32 %v870, 0.0
  %v875 = vmax.f32 %v871, 0.0
  %v876 = vmax.f32 %v872, 0.0
  %v877 = vrot.slane %v873, 7
  %v878 = vrot.slane %v874, 7
  %v879 = vrot.slane %v875, 7
  %v880 = vrot.slane %v876, 7
  %v881 = vsel %vm221, %v879, %v880
  %v882 = vsel %vm221, %v878, %v879
  %v883 = vsel %vm221, %v877, %v878
  %v884 = vsel %vm221, %v880, %v877
  %v885 = vsel %vm230, %v884, 0.0
  %v886 = vsel %vm231, %v883, 0.0
  %v887 = vsel %vm232, %v882, 0.0
  %v888 = vsel %vm233, %v881, 0.0
  %v889 = vrot.slane %v873, 1
  %v890 = vrot.slane %v874, 1
  %v891 = vrot.slane %v875, 1
  %v892 = vrot.slane %v876, 1
  %v893 = vsel %vm242, %v891, %v892
  %v894 = vsel %vm242, %v890, %v891
  %v895 = vsel %vm242, %v889, %v890
  %v896 = vsel %vm242, %v892, %v889
  %v897 = vsel %vm251, %v895, 0.0
  %v898 = vsel %vm252, %v894, 0.0
  %v899 = vsel %vm253, %v893, 0.0
  %v900 = vsel %vm254, %v896, 0.0
  %v902 = vlaneseq
  %v903 = vshrl.u32 %v902, 7
  %v904 = vsub.s32 0, %v903
  %v905 = vrot.slane %v154, %v904
  %907 = vmatprep.subr.mxu0 0.0
  %908 = vmatpush1.msra.mxu0 %v99
  %909 = vmatprep.subr.mxu0 0.0
  %910 = vmatpush1.msra.mxu0 %v100
  %911 = vmatprep.subr.mxu0 0.0
  %912 = vmatpush1.msra.mxu0 %v101
  %913 = vmatprep.subr.mxu0 0.0
  %914 = vmatpush1.msra.mxu0 %v102
  %915 = vmatprep.subr.mxu0 0.0
  %916 = vmatpush1.msra.mxu0 %v103
  %917 = vmatprep.subr.mxu0 0.0
  %918 = vmatpush1.msra.mxu0 %v104
  %919 = vmatprep.subr.mxu0 0.0
  %920 = vmatpush1.msra.mxu0 %v105
  %921 = vmatprep.subr.mxu0 0.0
  %922 = vmatpush1.msra.mxu0 %v106
  %923 = vmatprep.subr.mxu0 0.0
  %924 = vmatpush1.msra.mxu0 %v107
  %925 = vmatprep.subr.mxu0 0.0
  %926 = vmatpush1.msra.mxu0 %v108
  %927 = vmatprep.subr.mxu0 0.0
  %928 = vmatpush1.msra.mxu0 %v109
  %929 = vmatprep.subr.mxu0 0.0
  %930 = vmatpush1.msra.mxu0 %v110
  %931 = vmatprep.subr.mxu0 0.0
  %932 = vmatpush1.msra.mxu0 %v111
  %933 = vmatprep.subr.mxu0 0.0
  %934 = vmatpush1.msra.mxu0 %v112
  %935 = vmatprep.subr.mxu0 0.0
  %936 = vmatpush1.msra.mxu0 %v113
  %937 = vmatprep.subr.mxu0 0.0
  %938 = vmatpush1.msra.mxu0 %v114
  %939 = vmatprep.subr.mxu0 0.0
  %940 = vmatpush1.msra.mxu0 %v115
  %941 = vmatprep.subr.mxu0 0.0
  %942 = vmatpush1.msra.mxu0 %v116
  %943 = vmatprep.subr.mxu0 0.0
  %944 = vmatpush1.msra.mxu0 %v117
  %945 = vmatprep.subr.mxu0 0.0
  %946 = vmatpush1.msra.mxu0 %v118
  %947 = vmatprep.subr.mxu0 0.0
  %948 = vmatpush1.msra.mxu0 %v119
  %949 = vmatprep.subr.mxu0 0.0
  %950 = vmatpush1.msra.mxu0 %v120
  %951 = vmatprep.subr.mxu0 0.0
  %952 = vmatpush1.msra.mxu0 %v121
  %953 = vmatprep.subr.mxu0 0.0
  %954 = vmatpush1.msra.mxu0 %v122
  %955 = vmatprep.subr.mxu0 0.0
  %956 = vmatpush1.msra.mxu0 %v123
  %957 = vmatprep.subr.mxu0 0.0
  %958 = vmatpush1.msra.mxu0 %v124
  %959 = vmatprep.subr.mxu0 0.0
  %960 = vmatpush1.msra.mxu0 %v125
  %961 = vmatprep.subr.mxu0 0.0
  %962 = vmatpush1.msra.mxu0 %v126
  %963 = vmatprep.subr.mxu0 0.0
  %964 = vmatpush1.msra.mxu0 %v127
  %965 = vmatprep.subr.mxu0 0.0
  %966 = vmatpush1.msra.mxu0 %v128
  %967 = vmatprep.subr.mxu0 0.0
  %968 = vmatpush1.msra.mxu0 %v129
  %969 = vmatprep.subr.mxu0 0.0
  %970 = vmatpush1.msra.mxu0 %v130
  %971 = vmatprep.mubr.f32.mxu0 %v873
  %972 = vmatmul.mubr.f32.gmra.mrb[0].mxu0 %v885
  %v973 = vpop.f32.mrb[0].mxu0
  %v974 = vadd.f32 %v905, %v973
  %v975 = vpop.f32.mrb[0].mxu0
  %976 = vmatprep.mubr.f32.mxu0 %v874
  %977 = vmatmul.mubr.f32.gmra.mrb[0].mxu0 %v886
  %v978 = vpop.f32.mrb[0].mxu0
  %v979 = vadd.f32 %v905, %v978
  %v980 = vpop.f32.mrb[0].mxu0
  %981 = vmatprep.mubr.f32.mxu0 %v875
  %982 = vmatmul.mubr.f32.gmra.mrb[0].mxu0 %v887
  %v983 = vpop.f32.mrb[0].mxu0
  %v984 = vadd.f32 %v905, %v983
  %v985 = vpop.f32.mrb[0].mxu0
  %986 = vmatprep.mubr.f32.mxu0 %v876
  %987 = vmatmul.mubr.f32.gmra.mrb[0].mxu0 %v888
  %v988 = vpop.f32.mrb[0].mxu0
  %v989 = vadd.f32 %v905, %v988
  %v990 = vpop.f32.mrb[0].mxu0
  %991 = vdwg.mxu0
  %992 = vmatprep.subr.mxu0 0.0
  %993 = vmatpush1.msra.mxu0 %v131
  %994 = vmatprep.subr.mxu0 0.0
  %995 = vmatpush1.msra.mxu0 %v132
  %996 = vmatprep.subr.mxu0 0.0
  %997 = vmatpush1.msra.mxu0 %v133
  %998 = vmatprep.subr.mxu0 0.0
  %999 = vmatpush1.msra.mxu0 %v134
  %1000 = vmatprep.subr.mxu0 0.0
  %1001 = vmatpush1.msra.mxu0 %v135
  %1002 = vmatprep.subr.mxu0 0.0
  %1003 = vmatpush1.msra.mxu0 %v136
  %1004 = vmatprep.subr.mxu0 0.0
  %1005 = vmatpush1.msra.mxu0 %v137
  %1006 = vmatprep.subr.mxu0 0.0
  %1007 = vmatpush1.msra.mxu0 %v138
  %1008 = vmatprep.subr.mxu0 0.0
  %1009 = vmatpush1.msra.mxu0 %v139
  %1010 = vmatprep.subr.mxu0 0.0
  %1011 = vmatpush1.msra.mxu0 %v140
  %1012 = vmatprep.subr.mxu0 0.0
  %1013 = vmatpush1.msra.mxu0 %v141
  %1014 = vmatprep.subr.mxu0 0.0
  %1015 = vmatpush1.msra.mxu0 %v142
  %1016 = vmatprep.subr.mxu0 0.0
  %1017 = vmatpush1.msra.mxu0 %v143
  %1018 = vmatprep.subr.mxu0 0.0
  %1019 = vmatpush1.msra.mxu0 %v144
  %1020 = vmatprep.subr.mxu0 0.0
  %1021 = vmatpush1.msra.mxu0 %v145
  %1022 = vmatprep.subr.mxu0 0.0
  %1023 = vmatpush1.msra.mxu0 %v146
  %1024 = vmatprep.subr.mxu0 0.0
  %1025 = vmatpush1.msra.mxu0 0.0
  %1026 = vmatprep.subr.mxu0 0.0
  %1027 = vmatpush1.msra.mxu0 0.0
  %1028 = vmatprep.subr.mxu0 0.0
  %1029 = vmatpush1.msra.mxu0 0.0
  %1030 = vmatprep.subr.mxu0 0.0
  %1031 = vmatpush1.msra.mxu0 0.0
  %1032 = vmatprep.subr.mxu0 0.0
  %1033 = vmatpush1.msra.mxu0 0.0
  %1034 = vmatprep.subr.mxu0 0.0
  %1035 = vmatpush1.msra.mxu0 0.0
  %1036 = vmatprep.subr.mxu0 0.0
  %1037 = vmatpush1.msra.mxu0 0.0
  %1038 = vmatprep.subr.mxu0 0.0
  %1039 = vmatpush1.msra.mxu0 0.0
  %1040 = vmatprep.subr.mxu0 0.0
  %1041 = vmatpush1.msra.mxu0 0.0
  %1042 = vmatprep.subr.mxu0 0.0
  %1043 = vmatpush1.msra.mxu0 0.0
  %1044 = vmatprep.subr.mxu0 0.0
  %1045 = vmatpush1.msra.mxu0 0.0
  %1046 = vmatprep.subr.mxu0 0.0
  %1047 = vmatpush1.msra.mxu0 0.0
  %1048 = vmatprep.subr.mxu0 0.0
  %1049 = vmatpush1.msra.mxu0 0.0
  %1050 = vmatprep.subr.mxu0 0.0
  %1051 = vmatpush1.msra.mxu0 0.0
  %1052 = vmatprep.subr.mxu0 0.0
  %1053 = vmatpush1.msra.mxu0 0.0
  %1054 = vmatprep.subr.mxu0 0.0
  %1055 = vmatpush1.msra.mxu0 0.0
  %1056 = vmatprep.mubr.f32.mxu0 0.0
  %1057 = vmatmul.mubr.f32.gmra.mrb[0].mxu0 %v897
  %v1058 = vpop.f32.mrb[0].mxu0
  %v1059 = vadd.f32 %v974, %v1058
  %v1060 = vpop.f32.mrb[0].mxu0
  %1061 = vmatprep.mubr.f32.mxu0 0.0
  %1062 = vmatmul.mubr.f32.gmra.mrb[0].mxu0 %v898
  %v1063 = vpop.f32.mrb[0].mxu0
  %v1064 = vadd.f32 %v979, %v1063
  %v1065 = vpop.f32.mrb[0].mxu0
  %1066 = vmatprep.mubr.f32.mxu0 0.0
  %1067 = vmatmul.mubr.f32.gmra.mrb[0].mxu0 %v899
  %v1068 = vpop.f32.mrb[0].mxu0
  %v1069 = vadd.f32 %v984, %v1068
  %v1070 = vpop.f32.mrb[0].mxu0
  %1071 = vmatprep.mubr.f32.mxu0 0.0
  %1072 = vmatmul.mubr.f32.gmra.mrb[0].mxu0 %v900
  %v1073 = vpop.f32.mrb[0].mxu0
  %v1074 = vadd.f32 %v989, %v1073
  %v1075 = vpop.f32.mrb[0].mxu0
  %1076 = vdwg.mxu0
  %v1078 = vlaneseq
  %v1079 = vshrl.u32 %v1078, 7
  %v1080 = vsub.s32 0, %v1079
  %v1081 = vrot.slane %v155, %v1080
  %1083 = vmatprep.subr.mxu0 0.0
  %1084 = vmatpush1.msra.mxu0 %v147
  %1085 = vmatprep.subr.mxu0 0.0
  %1086 = vmatpush1.msra.mxu0 0.0
  %1087 = vmatprep.subr.mxu0 0.0
  %1088 = vmatpush1.msra.mxu0 0.0
  %1089 = vmatprep.subr.mxu0 0.0
  %1090 = vmatpush1.msra.mxu0 0.0
  %1091 = vmatprep.subr.mxu0 0.0
  %1092 = vmatpush1.msra.mxu0 0.0
  %1093 = vmatprep.subr.mxu0 0.0
  %1094 = vmatpush1.msra.mxu0 0.0
  %1095 = vmatprep.subr.mxu0 0.0
  %1096 = vmatpush1.msra.mxu0 0.0
  %1097 = vmatprep.subr.mxu0 0.0
  %1098 = vmatpush1.msra.mxu0 0.0
  %1099 = vmatprep.subr.mxu0 0.0
  %1100 = vmatpush1.msra.mxu0 0.0
  %1101 = vmatprep.subr.mxu0 0.0
  %1102 = vmatpush1.msra.mxu0 0.0
  %1103 = vmatprep.subr.mxu0 0.0
  %1104 = vmatpush1.msra.mxu0 0.0
  %1105 = vmatprep.subr.mxu0 0.0
  %1106 = vmatpush1.msra.mxu0 0.0
  %1107 = vmatprep.subr.mxu0 0.0
  %1108 = vmatpush1.msra.mxu0 0.0
  %1109 = vmatprep.subr.mxu0 0.0
  %1110 = vmatpush1.msra.mxu0 0.0
  %1111 = vmatprep.subr.mxu0 0.0
  %1112 = vmatpush1.msra.mxu0 0.0
  %1113 = vmatprep.subr.mxu0 0.0
  %1114 = vmatpush1.msra.mxu0 0.0
  %1115 = vmatprep.subr.mxu0 0.0
  %1116 = vmatpush1.msra.mxu0 0.0
  %1117 = vmatprep.subr.mxu0 0.0
  %1118 = vmatpush1.msra.mxu0 0.0
  %1119 = vmatprep.subr.mxu0 0.0
  %1120 = vmatpush1.msra.mxu0 0.0
  %1121 = vmatprep.subr.mxu0 0.0
  %1122 = vmatpush1.msra.mxu0 0.0
  %1123 = vmatprep.subr.mxu0 0.0
  %1124 = vmatpush1.msra.mxu0 0.0
  %1125 = vmatprep.subr.mxu0 0.0
  %1126 = vmatpush1.msra.mxu0 0.0
  %1127 = vmatprep.subr.mxu0 0.0
  %1128 = vmatpush1.msra.mxu0 0.0
  %1129 = vmatprep.subr.mxu0 0.0
  %1130 = vmatpush1.msra.mxu0 0.0
  %1131 = vmatprep.subr.mxu0 0.0
  %1132 = vmatpush1.msra.mxu0 0.0
  %1133 = vmatprep.subr.mxu0 0.0
  %1134 = vmatpush1.msra.mxu0 0.0
  %1135 = vmatprep.subr.mxu0 0.0
  %1136 = vmatpush1.msra.mxu0 0.0
  %1137 = vmatprep.subr.mxu0 0.0
  %1138 = vmatpush1.msra.mxu0 0.0
  %1139 = vmatprep.subr.mxu0 0.0
  %1140 = vmatpush1.msra.mxu0 0.0
  %1141 = vmatprep.subr.mxu0 0.0
  %1142 = vmatpush1.msra.mxu0 0.0
  %1143 = vmatprep.subr.mxu0 0.0
  %1144 = vmatpush1.msra.mxu0 0.0
  %1145 = vmatprep.subr.mxu0 0.0
  %1146 = vmatpush1.msra.mxu0 0.0
  %1147 = vmatprep.mubr.f32.mxu0 0.0
  %1148 = vmatmul.mubr.f32.gmra.mrb[0].mxu0 %v261
  %v1149 = vpop.f32.mrb[0].mxu0
  %v1150 = vadd.f32 %v1081, %v1149
  %v1151 = vpop.f32.mrb[0].mxu0
  %1152 = vmatprep.mubr.f32.mxu0 0.0
  %1153 = vmatmul.mubr.f32.gmra.mrb[0].mxu0 %v264
  %v1154 = vpop.f32.mrb[0].mxu0
  %v1155 = vadd.f32 %v1081, %v1154
  %v1156 = vpop.f32.mrb[0].mxu0
  %1157 = vmatprep.mubr.f32.mxu0 0.0
  %1158 = vmatmul.mubr.f32.gmra.mrb[0].mxu0 %v267
  %v1159 = vpop.f32.mrb[0].mxu0
  %v1160 = vadd.f32 %v1081, %v1159
  %v1161 = vpop.f32.mrb[0].mxu0
  %1162 = vmatprep.mubr.f32.mxu0 0.0
  %1163 = vmatmul.mubr.f32.gmra.mrb[0].mxu0 %v270
  %v1164 = vpop.f32.mrb[0].mxu0
  %v1165 = vadd.f32 %v1081, %v1164
  %v1166 = vpop.f32.mrb[0].mxu0
  %1167 = vdwg.mxu0
  %v1168 = vadd.f32 %v44, %v1150
  %v1169 = vadd.f32 %v45, %v1155
  %v1170 = vadd.f32 %v46, %v1160
  %v1171 = vadd.f32 %v47, %v1165
  %v1172 = vadd.f32 %v1168, %v1059
  %v1173 = vadd.f32 %v1169, %v1064
  %v1174 = vadd.f32 %v1170, %v1069
  %v1175 = vadd.f32 %v1171, %v1074
  %v1176 = vrot.slane %v1172, 7
  %v1177 = vrot.slane %v1173, 7
  %v1178 = vrot.slane %v1174, 7
  %v1179 = vrot.slane %v1175, 7
  %v1180 = vsel %vm221, %v1178, %v1179
  %v1181 = vsel %vm221, %v1177, %v1178
  %v1182 = vsel %vm221, %v1176, %v1177
  %v1183 = vsel %vm221, %v1179, %v1176
  %v1184 = vsel %vm230, %v1183, 0.0
  %v1185 = vsel %vm231, %v1182, 0.0
  %v1186 = vsel %vm232, %v1181, 0.0
  %v1187 = vsel %vm233, %v1180, 0.0
  %v1188 = vrot.slane %v1172, 1
  %v1189 = vrot.slane %v1173, 1
  %v1190 = vrot.slane %v1174, 1
  %v1191 = vrot.slane %v1175, 1
  %v1192 = vsel %vm242, %v1190, %v1191
  %v1193 = vsel %vm242, %v1189, %v1190
  %v1194 = vsel %vm242, %v1188, %v1189
  %v1195 = vsel %vm242, %v1191, %v1188
  %v1196 = vsel %vm251, %v1194, 0.0
  %v1197 = vsel %vm252, %v1193, 0.0
  %v1198 = vsel %vm253, %v1192, 0.0
  %v1199 = vsel %vm254, %v1195, 0.0
  %v1201 = vsel %vm259, %v1172, 0
  %v1204 = vsel %vm259, %v1173, 0
  %v1207 = vsel %vm259, %v1174, 0
  %v1210 = vsel %vm259, %v1175, 0
  %1212 = vmatprep.subr.mxu0 0.0
  %1213 = vmatpush1.msra.mxu0 %v49
  %1214 = vmatprep.subr.mxu0 0.0
  %1215 = vmatpush1.msra.mxu0 0.0
  %1216 = vmatprep.subr.mxu0 0.0
  %1217 = vmatpush1.msra.mxu0 0.0
  %1218 = vmatprep.subr.mxu0 0.0
  %1219 = vmatpush1.msra.mxu0 0.0
  %1220 = vmatprep.subr.mxu0 0.0
  %1221 = vmatpush1.msra.mxu0 0.0
  %1222 = vmatprep.subr.mxu0 0.0
  %1223 = vmatpush1.msra.mxu0 0.0
  %1224 = vmatprep.subr.mxu0 0.0
  %1225 = vmatpush1.msra.mxu0 0.0
  %1226 = vmatprep.subr.mxu0 0.0
  %1227 = vmatpush1.msra.mxu0 0.0
  %1228 = vmatprep.subr.mxu0 0.0
  %1229 = vmatpush1.msra.mxu0 0.0
  %1230 = vmatprep.subr.mxu0 0.0
  %1231 = vmatpush1.msra.mxu0 0.0
  %1232 = vmatprep.subr.mxu0 0.0
  %1233 = vmatpush1.msra.mxu0 0.0
  %1234 = vmatprep.subr.mxu0 0.0
  %1235 = vmatpush1.msra.mxu0 0.0
  %1236 = vmatprep.subr.mxu0 0.0
  %1237 = vmatpush1.msra.mxu0 0.0
  %1238 = vmatprep.subr.mxu0 0.0
  %1239 = vmatpush1.msra.mxu0 0.0
  %1240 = vmatprep.subr.mxu0 0.0
  %1241 = vmatpush1.msra.mxu0 0.0
  %1242 = vmatprep.subr.mxu0 0.0
  %1243 = vmatpush1.msra.mxu0 0.0
  %1244 = vmatprep.subr.mxu0 0.0
  %1245 = vmatpush1.msra.mxu0 0.0
  %1246 = vmatprep.subr.mxu0 0.0
  %1247 = vmatpush1.msra.mxu0 0.0
  %1248 = vmatprep.subr.mxu0 0.0
  %1249 = vmatpush1.msra.mxu0 0.0
  %1250 = vmatprep.subr.mxu0 0.0
  %1251 = vmatpush1.msra.mxu0 0.0
  %1252 = vmatprep.subr.mxu0 0.0
  %1253 = vmatpush1.msra.mxu0 0.0
  %1254 = vmatprep.subr.mxu0 0.0
  %1255 = vmatpush1.msra.mxu0 0.0
  %1256 = vmatprep.subr.mxu0 0.0
  %1257 = vmatpush1.msra.mxu0 0.0
  %1258 = vmatprep.subr.mxu0 0.0
  %1259 = vmatpush1.msra.mxu0 0.0
  %1260 = vmatprep.subr.mxu0 0.0
  %1261 = vmatpush1.msra.mxu0 0.0
  %1262 = vmatprep.subr.mxu0 0.0
  %1263 = vmatpush1.msra.mxu0 0.0
  %1264 = vmatprep.subr.mxu0 0.0
  %1265 = vmatpush1.msra.mxu0 0.0
  %1266 = vmatprep.subr.mxu0 0.0
  %1267 = vmatpush1.msra.mxu0 0.0
  %1268 = vmatprep.subr.mxu0 0.0
  %1269 = vmatpush1.msra.mxu0 0.0
  %1270 = vmatprep.subr.mxu0 0.0
  %1271 = vmatpush1.msra.mxu0 0.0
  %1272 = vmatprep.subr.mxu0 0.0
  %1273 = vmatpush1.msra.mxu0 0.0
  %1274 = vmatprep.subr.mxu0 0.0
  %1275 = vmatpush1.msra.mxu0 0.0
  %1276 = vmatprep.mubr.f32.mxu0 0.0
  %1277 = vmatmul.mubr.f32.gmra.mrb[0].mxu0 %v1201
  %v1278 = vpop.f32.mrb[0].mxu0
  %v1279 = vadd.f32 0.0, %v1278
  %v1280 = vpop.f32.mrb[0].mxu0
  %1281 = vmatprep.mubr.f32.mxu0 0.0
  %1282 = vmatmul.mubr.f32.gmra.mrb[0].mxu0 %v1204
  %v1283 = vpop.f32.mrb[0].mxu0
  %v1284 = vadd.f32 0.0, %v1283
  %v1285 = vpop.f32.mrb[0].mxu0
  %1286 = vmatprep.mubr.f32.mxu0 0.0
  %1287 = vmatmul.mubr.f32.gmra.mrb[0].mxu0 %v1207
  %v1288 = vpop.f32.mrb[0].mxu0
  %v1289 = vadd.f32 0.0, %v1288
  %v1290 = vpop.f32.mrb[0].mxu0
  %1291 = vmatprep.mubr.f32.mxu0 0.0
  %1292 = vmatmul.mubr.f32.gmra.mrb[0].mxu0 %v1210
  %v1293 = vpop.f32.mrb[0].mxu0
  %v1294 = vadd.f32 0.0, %v1293
  %v1295 = vpop.f32.mrb[0].mxu0
  %1296 = vdwg.mxu0
  %v1298 = vsel %vm259, %v1184, 0
  %v1301 = vsel %vm259, %v1185, 0
  %v1304 = vsel %vm259, %v1186, 0
  %v1307 = vsel %vm259, %v1187, 0
  %1309 = vmatprep.subr.mxu0 0.0
  %1310 = vmatpush1.msra.mxu0 %v48
  %1311 = vmatprep.subr.mxu0 0.0
  %1312 = vmatpush1.msra.mxu0 0.0
  %1313 = vmatprep.subr.mxu0 0.0
  %1314 = vmatpush1.msra.mxu0 0.0
  %1315 = vmatprep.subr.mxu0 0.0
  %1316 = vmatpush1.msra.mxu0 0.0
  %1317 = vmatprep.subr.mxu0 0.0
  %1318 = vmatpush1.msra.mxu0 0.0
  %1319 = vmatprep.subr.mxu0 0.0
  %1320 = vmatpush1.msra.mxu0 0.0
  %1321 = vmatprep.subr.mxu0 0.0
  %1322 = vmatpush1.msra.mxu0 0.0
  %1323 = vmatprep.subr.mxu0 0.0
  %1324 = vmatpush1.msra.mxu0 0.0
  %1325 = vmatprep.subr.mxu0 0.0
  %1326 = vmatpush1.msra.mxu0 0.0
  %1327 = vmatprep.subr.mxu0 0.0
  %1328 = vmatpush1.msra.mxu0 0.0
  %1329 = vmatprep.subr.mxu0 0.0
  %1330 = vmatpush1.msra.mxu0 0.0
  %1331 = vmatprep.subr.mxu0 0.0
  %1332 = vmatpush1.msra.mxu0 0.0
  %1333 = vmatprep.subr.mxu0 0.0
  %1334 = vmatpush1.msra.mxu0 0.0
  %1335 = vmatprep.subr.mxu0 0.0
  %1336 = vmatpush1.msra.mxu0 0.0
  %1337 = vmatprep.subr.mxu0 0.0
  %1338 = vmatpush1.msra.mxu0 0.0
  %1339 = vmatprep.subr.mxu0 0.0
  %1340 = vmatpush1.msra.mxu0 0.0
  %1341 = vmatprep.subr.mxu0 0.0
  %1342 = vmatpush1.msra.mxu0 0.0
  %1343 = vmatprep.subr.mxu0 0.0
  %1344 = vmatpush1.msra.mxu0 0.0
  %1345 = vmatprep.subr.mxu0 0.0
  %1346 = vmatpush1.msra.mxu0 0.0
  %1347 = vmatprep.subr.mxu0 0.0
  %1348 = vmatpush1.msra.mxu0 0.0
  %1349 = vmatprep.subr.mxu0 0.0
  %1350 = vmatpush1.msra.mxu0 0.0
  %1351 = vmatprep.subr.mxu0 0.0
  %1352 = vmatpush1.msra.mxu0 0.0
  %1353 = vmatprep.subr.mxu0 0.0
  %1354 = vmatpush1.msra.mxu0 0.0
  %1355 = vmatprep.subr.mxu0 0.0
  %1356 = vmatpush1.msra.mxu0 0.0
  %1357 = vmatprep.subr.mxu0 0.0
  %1358 = vmatpush1.msra.mxu0 0.0
  %1359 = vmatprep.subr.mxu0 0.0
  %1360 = vmatpush1.msra.mxu0 0.0
  %1361 = vmatprep.subr.mxu0 0.0
  %1362 = vmatpush1.msra.mxu0 0.0
  %1363 = vmatprep.subr.mxu0 0.0
  %1364 = vmatpush1.msra.mxu0 0.0
  %1365 = vmatprep.subr.mxu0 0.0
  %1366 = vmatpush1.msra.mxu0 0.0
  %1367 = vmatprep.subr.mxu0 0.0
  %1368 = vmatpush1.msra.mxu0 0.0
  %1369 = vmatprep.subr.mxu0 0.0
  %1370 = vmatpush1.msra.mxu0 0.0
  %1371 = vmatprep.subr.mxu0 0.0
  %1372 = vmatpush1.msra.mxu0 0.0
  %1373 = vmatprep.mubr.f32.mxu0 0.0
  %1374 = vmatmul.mubr.f32.gmra.mrb[0].mxu0 %v1298
  %v1375 = vpop.f32.mrb[0].mxu0
  %v1376 = vadd.f32 %v1279, %v1375
  %v1377 = vpop.f32.mrb[0].mxu0
  %1378 = vmatprep.mubr.f32.mxu0 0.0
  %1379 = vmatmul.mubr.f32.gmra.mrb[0].mxu0 %v1301
  %v1380 = vpop.f32.mrb[0].mxu0
  %v1381 = vadd.f32 %v1284, %v1380
  %v1382 = vpop.f32.mrb[0].mxu0
  %1383 = vmatprep.mubr.f32.mxu0 0.0
  %1384 = vmatmul.mubr.f32.gmra.mrb[0].mxu0 %v1304
  %v1385 = vpop.f32.mrb[0].mxu0
  %v1386 = vadd.f32 %v1289, %v1385
  %v1387 = vpop.f32.mrb[0].mxu0
  %1388 = vmatprep.mubr.f32.mxu0 0.0
  %1389 = vmatmul.mubr.f32.gmra.mrb[0].mxu0 %v1307
  %v1390 = vpop.f32.mrb[0].mxu0
  %v1391 = vadd.f32 %v1294, %v1390
  %v1392 = vpop.f32.mrb[0].mxu0
  %1393 = vdwg.mxu0
  %v1395 = vsel %vm259, %v1196, 0
  %v1398 = vsel %vm259, %v1197, 0
  %v1401 = vsel %vm259, %v1198, 0
  %v1404 = vsel %vm259, %v1199, 0
  %1406 = vmatprep.subr.mxu0 0.0
  %1407 = vmatpush1.msra.mxu0 %v50
  %1408 = vmatprep.subr.mxu0 0.0
  %1409 = vmatpush1.msra.mxu0 0.0
  %1410 = vmatprep.subr.mxu0 0.0
  %1411 = vmatpush1.msra.mxu0 0.0
  %1412 = vmatprep.subr.mxu0 0.0
  %1413 = vmatpush1.msra.mxu0 0.0
  %1414 = vmatprep.subr.mxu0 0.0
  %1415 = vmatpush1.msra.mxu0 0.0
  %1416 = vmatprep.subr.mxu0 0.0
  %1417 = vmatpush1.msra.mxu0 0.0
  %1418 = vmatprep.subr.mxu0 0.0
  %1419 = vmatpush1.msra.mxu0 0.0
  %1420 = vmatprep.subr.mxu0 0.0
  %1421 = vmatpush1.msra.mxu0 0.0
  %1422 = vmatprep.subr.mxu0 0.0
  %1423 = vmatpush1.msra.mxu0 0.0
  %1424 = vmatprep.subr.mxu0 0.0
  %1425 = vmatpush1.msra.mxu0 0.0
  %1426 = vmatprep.subr.mxu0 0.0
  %1427 = vmatpush1.msra.mxu0 0.0
  %1428 = vmatprep.subr.mxu0 0.0
  %1429 = vmatpush1.msra.mxu0 0.0
  %1430 = vmatprep.subr.mxu0 0.0
  %1431 = vmatpush1.msra.mxu0 0.0
  %1432 = vmatprep.subr.mxu0 0.0
  %1433 = vmatpush1.msra.mxu0 0.0
  %1434 = vmatprep.subr.mxu0 0.0
  %1435 = vmatpush1.msra.mxu0 0.0
  %1436 = vmatprep.subr.mxu0 0.0
  %1437 = vmatpush1.msra.mxu0 0.0
  %1438 = vmatprep.subr.mxu0 0.0
  %1439 = vmatpush1.msra.mxu0 0.0
  %1440 = vmatprep.subr.mxu0 0.0
  %1441 = vmatpush1.msra.mxu0 0.0
  %1442 = vmatprep.subr.mxu0 0.0
  %1443 = vmatpush1.msra.mxu0 0.0
  %1444 = vmatprep.subr.mxu0 0.0
  %1445 = vmatpush1.msra.mxu0 0.0
  %1446 = vmatprep.subr.mxu0 0.0
  %1447 = vmatpush1.msra.mxu0 0.0
  %1448 = vmatprep.subr.mxu0 0.0
  %1449 = vmatpush1.msra.mxu0 0.0
  %1450 = vmatprep.subr.mxu0 0.0
  %1451 = vmatpush1.msra.mxu0 0.0
  %1452 = vmatprep.subr.mxu0 0.0
  %1453 = vmatpush1.msra.mxu0 0.0
  %1454 = vmatprep.subr.mxu0 0.0
  %1455 = vmatpush1.msra.mxu0 0.0
  %1456 = vmatprep.subr.mxu0 0.0
  %1457 = vmatpush1.msra.mxu0 0.0
  %1458 = vmatprep.subr.mxu0 0.0
  %1459 = vmatpush1.msra.mxu0 0.0
  %1460 = vmatprep.subr.mxu0 0.0
  %1461 = vmatpush1.msra.mxu0 0.0
  %1462 = vmatprep.subr.mxu0 0.0
  %1463 = vmatpush1.msra.mxu0 0.0
  %1464 = vmatprep.subr.mxu0 0.0
  %1465 = vmatpush1.msra.mxu0 0.0
  %1466 = vmatprep.subr.mxu0 0.0
  %1467 = vmatpush1.msra.mxu0 0.0
  %1468 = vmatprep.subr.mxu0 0.0
  %1469 = vmatpush1.msra.mxu0 0.0
  %1470 = vmatprep.mubr.f32.mxu0 0.0
  %1471 = vmatmul.mubr.f32.gmra.mrb[0].mxu0 %v1395
  %v1472 = vpop.f32.mrb[0].mxu0
  %v1473 = vadd.f32 0.0, %v1472
  %v1474 = vpop.f32.mrb[0].mxu0
  %1475 = vmatprep.mubr.f32.mxu0 0.0
  %1476 = vmatmul.mubr.f32.gmra.mrb[0].mxu0 %v1398
  %v1477 = vpop.f32.mrb[0].mxu0
  %v1478 = vadd.f32 0.0, %v1477
  %v1479 = vpop.f32.mrb[0].mxu0
  %1480 = vmatprep.mubr.f32.mxu0 0.0
  %1481 = vmatmul.mubr.f32.gmra.mrb[0].mxu0 %v1401
  %v1482 = vpop.f32.mrb[0].mxu0
  %v1483 = vadd.f32 0.0, %v1482
  %v1484 = vpop.f32.mrb[0].mxu0
  %1485 = vmatprep.mubr.f32.mxu0 0.0
  %1486 = vmatmul.mubr.f32.gmra.mrb[0].mxu0 %v1404
  %v1487 = vpop.f32.mrb[0].mxu0
  %v1488 = vadd.f32 0.0, %v1487
  %v1489 = vpop.f32.mrb[0].mxu0
  %1490 = vdwg.mxu0
  %v1491 = vadd.f32 %v1376, %v1473
  %v1492 = vadd.f32 %v1381, %v1478
  %v1493 = vadd.f32 %v1386, %v1483
  %v1494 = vadd.f32 %v1391, %v1488
  %v1495 = vadd.f32 %v1491, %v559
  %v1496 = vadd.f32 %v1492, %v559
  %v1497 = vadd.f32 %v1493, %v559
  %v1498 = vadd.f32 %v1494, %v559
  %v1499 = vadd.f32 %v1495, %v1496
  %v1500 = vadd.f32 %v1499, %v1497
  %v1501 = vadd.f32 %v1500, %v1498
  %v1502 = vrot.slane %v1501, 4
  %v1503 = vadd.f32 %v1501, %v1502
  %v1504 = vrot.slane %v1503, 2
  %v1505 = vadd.f32 %v1503, %v1504
  %v1506 = vrot.slane %v1505, 1
  %v1507 = vadd.f32 %v1505, %v1506
  %v1508 = vmul.f32 %v1495, %v1495
  %v1509 = vmul.f32 %v1496, %v1496
  %v1510 = vmul.f32 %v1497, %v1497
  %v1511 = vmul.f32 %v1498, %v1498
  %v1512 = vadd.f32 %v1508, %v1509
  %v1513 = vadd.f32 %v1512, %v1510
  %v1514 = vadd.f32 %v1513, %v1511
  %v1515 = vrot.slane %v1514, 4
  %v1516 = vadd.f32 %v1514, %v1515
  %v1517 = vrot.slane %v1516, 2
  %v1518 = vadd.f32 %v1516, %v1517
  %v1519 = vrot.slane %v1518, 1
  %v1520 = vadd.f32 %v1518, %v1519
  %v1521 = vmul.f32 %v1507, 0.03125
  %v1522 = vmul.f32 %v1520, 0.03125
  %v1523 = vmul.f32 %v1521, %v1521
  %v1524 = vsub.f32 %v1522, %v1523
  %v1525 = vmax.f32 %v1524, 0.0
  %v1526 = vadd.f32 %v1525, 1e-05
  %v1527 = vrsqrt.pop %v1526
  %v1528 = vmul.f32 %v149, %v1527
  %v1529 = vmul.f32 %v1521, %v1528
  %v1530 = vsub.f32 %v150, %v1529
  %v1532 = vlaneseq
  %v1533 = vshrl.u32 %v1532, 7
  %v1534 = vsub.s32 0, %v1533
  %v1535 = vrot.slane %v1528, %v1534
  %v1537 = vmul.f32 %v1495, %v1535
  %v1538 = vmul.f32 %v1496, %v1535
  %v1539 = vmul.f32 %v1497, %v1535
  %v1540 = vmul.f32 %v1498, %v1535
  %v1542 = vlaneseq
  %v1543 = vshrl.u32 %v1542, 7
  %v1544 = vsub.s32 0, %v1543
  %v1545 = vrot.slane %v1530, %v1544
  %v1547 = vadd.f32 %v1537, %v1545
  %v1548 = vadd.f32 %v1538, %v1545
  %v1549 = vadd.f32 %v1539, %v1545
  %v1550 = vadd.f32 %v1540, %v1545
  %v1551 = vmax.f32 %v1547, 0.0
  %v1552 = vmax.f32 %v1548, 0.0
  %v1553 = vmax.f32 %v1549, 0.0
  %v1554 = vmax.f32 %v1550, 0.0
  %v1555 = vrot.slane %v1551, 7
  %v1556 = vrot.slane %v1552, 7
  %v1557 = vrot.slane %v1553, 7
  %v1558 = vrot.slane %v1554, 7
  %v1559 = vsel %vm221, %v1557, %v1558
  %v1560 = vsel %vm221, %v1556, %v1557
  %v1561 = vsel %vm221, %v1555, %v1556
  %v1562 = vsel %vm221, %v1558, %v1555
  %v1563 = vsel %vm230, %v1562, 0.0
  %v1564 = vsel %vm231, %v1561, 0.0
  %v1565 = vsel %vm232, %v1560, 0.0
  %v1566 = vsel %vm233, %v1559, 0.0
  %v1567 = vrot.slane %v1551, 1
  %v1568 = vrot.slane %v1552, 1
  %v1569 = vrot.slane %v1553, 1
  %v1570 = vrot.slane %v1554, 1
  %v1571 = vsel %vm242, %v1569, %v1570
  %v1572 = vsel %vm242, %v1568, %v1569
  %v1573 = vsel %vm242, %v1567, %v1568
  %v1574 = vsel %vm242, %v1570, %v1567
  %v1575 = vsel %vm251, %v1573, 0.0
  %v1576 = vsel %vm252, %v1572, 0.0
  %v1577 = vsel %vm253, %v1571, 0.0
  %v1578 = vsel %vm254, %v1574, 0.0
  %1579 = vmatprep.subr.mxu0 0.0
  %1580 = vmatpush1.msra.mxu0 %v51
  %1581 = vmatprep.subr.mxu0 0.0
  %1582 = vmatpush1.msra.mxu0 %v52
  %1583 = vmatprep.subr.mxu0 0.0
  %1584 = vmatpush1.msra.mxu0 %v53
  %1585 = vmatprep.subr.mxu0 0.0
  %1586 = vmatpush1.msra.mxu0 %v54
  %1587 = vmatprep.subr.mxu0 0.0
  %1588 = vmatpush1.msra.mxu0 %v55
  %1589 = vmatprep.subr.mxu0 0.0
  %1590 = vmatpush1.msra.mxu0 %v56
  %1591 = vmatprep.subr.mxu0 0.0
  %1592 = vmatpush1.msra.mxu0 %v57
  %1593 = vmatprep.subr.mxu0 0.0
  %1594 = vmatpush1.msra.mxu0 %v58
  %1595 = vmatprep.subr.mxu0 0.0
  %1596 = vmatpush1.msra.mxu0 %v59
  %1597 = vmatprep.subr.mxu0 0.0
  %1598 = vmatpush1.msra.mxu0 %v60
  %1599 = vmatprep.subr.mxu0 0.0
  %1600 = vmatpush1.msra.mxu0 %v61
  %1601 = vmatprep.subr.mxu0 0.0
  %1602 = vmatpush1.msra.mxu0 %v62
  %1603 = vmatprep.subr.mxu0 0.0
  %1604 = vmatpush1.msra.mxu0 %v63
  %1605 = vmatprep.subr.mxu0 0.0
  %1606 = vmatpush1.msra.mxu0 %v64
  %1607 = vmatprep.subr.mxu0 0.0
  %1608 = vmatpush1.msra.mxu0 %v65
  %1609 = vmatprep.subr.mxu0 0.0
  %1610 = vmatpush1.msra.mxu0 %v66
  %1611 = vmatprep.subr.mxu0 0.0
  %1612 = vmatpush1.msra.mxu0 %v67
  %1613 = vmatprep.subr.mxu0 0.0
  %1614 = vmatpush1.msra.mxu0 %v68
  %1615 = vmatprep.subr.mxu0 0.0
  %1616 = vmatpush1.msra.mxu0 %v69
  %1617 = vmatprep.subr.mxu0 0.0
  %1618 = vmatpush1.msra.mxu0 %v70
  %1619 = vmatprep.subr.mxu0 0.0
  %1620 = vmatpush1.msra.mxu0 %v71
  %1621 = vmatprep.subr.mxu0 0.0
  %1622 = vmatpush1.msra.mxu0 %v72
  %1623 = vmatprep.subr.mxu0 0.0
  %1624 = vmatpush1.msra.mxu0 %v73
  %1625 = vmatprep.subr.mxu0 0.0
  %1626 = vmatpush1.msra.mxu0 %v74
  %1627 = vmatprep.subr.mxu0 0.0
  %1628 = vmatpush1.msra.mxu0 %v75
  %1629 = vmatprep.subr.mxu0 0.0
  %1630 = vmatpush1.msra.mxu0 %v76
  %1631 = vmatprep.subr.mxu0 0.0
  %1632 = vmatpush1.msra.mxu0 %v77
  %1633 = vmatprep.subr.mxu0 0.0
  %1634 = vmatpush1.msra.mxu0 %v78
  %1635 = vmatprep.subr.mxu0 0.0
  %1636 = vmatpush1.msra.mxu0 %v79
  %1637 = vmatprep.subr.mxu0 0.0
  %1638 = vmatpush1.msra.mxu0 %v80
  %1639 = vmatprep.subr.mxu0 0.0
  %1640 = vmatpush1.msra.mxu0 %v81
  %1641 = vmatprep.subr.mxu0 0.0
  %1642 = vmatpush1.msra.mxu0 %v82
  %1643 = vmatprep.mubr.f32.mxu0 %v1551
  %1644 = vmatmul.mubr.f32.gmra.mrb[0].mxu0 %v1563
  %v1645 = vpop.f32.mrb[0].mxu0
  %v1646 = vadd.f32 %v649, %v1645
  %v1647 = vpop.f32.mrb[0].mxu0
  %1648 = vmatprep.mubr.f32.mxu0 %v1552
  %1649 = vmatmul.mubr.f32.gmra.mrb[0].mxu0 %v1564
  %v1650 = vpop.f32.mrb[0].mxu0
  %v1651 = vadd.f32 %v649, %v1650
  %v1652 = vpop.f32.mrb[0].mxu0
  %1653 = vmatprep.mubr.f32.mxu0 %v1553
  %1654 = vmatmul.mubr.f32.gmra.mrb[0].mxu0 %v1565
  %v1655 = vpop.f32.mrb[0].mxu0
  %v1656 = vadd.f32 %v649, %v1655
  %v1657 = vpop.f32.mrb[0].mxu0
  %1658 = vmatprep.mubr.f32.mxu0 %v1554
  %1659 = vmatmul.mubr.f32.gmra.mrb[0].mxu0 %v1566
  %v1660 = vpop.f32.mrb[0].mxu0
  %v1661 = vadd.f32 %v649, %v1660
  %v1662 = vpop.f32.mrb[0].mxu0
  %1663 = vdwg.mxu0
  %1664 = vmatprep.subr.mxu0 0.0
  %1665 = vmatpush1.msra.mxu0 %v83
  %1666 = vmatprep.subr.mxu0 0.0
  %1667 = vmatpush1.msra.mxu0 %v84
  %1668 = vmatprep.subr.mxu0 0.0
  %1669 = vmatpush1.msra.mxu0 %v85
  %1670 = vmatprep.subr.mxu0 0.0
  %1671 = vmatpush1.msra.mxu0 %v86
  %1672 = vmatprep.subr.mxu0 0.0
  %1673 = vmatpush1.msra.mxu0 %v87
  %1674 = vmatprep.subr.mxu0 0.0
  %1675 = vmatpush1.msra.mxu0 %v88
  %1676 = vmatprep.subr.mxu0 0.0
  %1677 = vmatpush1.msra.mxu0 %v89
  %1678 = vmatprep.subr.mxu0 0.0
  %1679 = vmatpush1.msra.mxu0 %v90
  %1680 = vmatprep.subr.mxu0 0.0
  %1681 = vmatpush1.msra.mxu0 %v91
  %1682 = vmatprep.subr.mxu0 0.0
  %1683 = vmatpush1.msra.mxu0 %v92
  %1684 = vmatprep.subr.mxu0 0.0
  %1685 = vmatpush1.msra.mxu0 %v93
  %1686 = vmatprep.subr.mxu0 0.0
  %1687 = vmatpush1.msra.mxu0 %v94
  %1688 = vmatprep.subr.mxu0 0.0
  %1689 = vmatpush1.msra.mxu0 %v95
  %1690 = vmatprep.subr.mxu0 0.0
  %1691 = vmatpush1.msra.mxu0 %v96
  %1692 = vmatprep.subr.mxu0 0.0
  %1693 = vmatpush1.msra.mxu0 %v97
  %1694 = vmatprep.subr.mxu0 0.0
  %1695 = vmatpush1.msra.mxu0 %v98
  %1696 = vmatprep.subr.mxu0 0.0
  %1697 = vmatpush1.msra.mxu0 0.0
  %1698 = vmatprep.subr.mxu0 0.0
  %1699 = vmatpush1.msra.mxu0 0.0
  %1700 = vmatprep.subr.mxu0 0.0
  %1701 = vmatpush1.msra.mxu0 0.0
  %1702 = vmatprep.subr.mxu0 0.0
  %1703 = vmatpush1.msra.mxu0 0.0
  %1704 = vmatprep.subr.mxu0 0.0
  %1705 = vmatpush1.msra.mxu0 0.0
  %1706 = vmatprep.subr.mxu0 0.0
  %1707 = vmatpush1.msra.mxu0 0.0
  %1708 = vmatprep.subr.mxu0 0.0
  %1709 = vmatpush1.msra.mxu0 0.0
  %1710 = vmatprep.subr.mxu0 0.0
  %1711 = vmatpush1.msra.mxu0 0.0
  %1712 = vmatprep.subr.mxu0 0.0
  %1713 = vmatpush1.msra.mxu0 0.0
  %1714 = vmatprep.subr.mxu0 0.0
  %1715 = vmatpush1.msra.mxu0 0.0
  %1716 = vmatprep.subr.mxu0 0.0
  %1717 = vmatpush1.msra.mxu0 0.0
  %1718 = vmatprep.subr.mxu0 0.0
  %1719 = vmatpush1.msra.mxu0 0.0
  %1720 = vmatprep.subr.mxu0 0.0
  %1721 = vmatpush1.msra.mxu0 0.0
  %1722 = vmatprep.subr.mxu0 0.0
  %1723 = vmatpush1.msra.mxu0 0.0
  %1724 = vmatprep.subr.mxu0 0.0
  %1725 = vmatpush1.msra.mxu0 0.0
  %1726 = vmatprep.subr.mxu0 0.0
  %1727 = vmatpush1.msra.mxu0 0.0
  %1728 = vmatprep.mubr.f32.mxu0 0.0
  %1729 = vmatmul.mubr.f32.gmra.mrb[0].mxu0 %v1575
  %v1730 = vpop.f32.mrb[0].mxu0
  %v1731 = vadd.f32 %v1646, %v1730
  %v1732 = vpop.f32.mrb[0].mxu0
  %1733 = vmatprep.mubr.f32.mxu0 0.0
  %1734 = vmatmul.mubr.f32.gmra.mrb[0].mxu0 %v1576
  %v1735 = vpop.f32.mrb[0].mxu0
  %v1736 = vadd.f32 %v1651, %v1735
  %v1737 = vpop.f32.mrb[0].mxu0
  %1738 = vmatprep.mubr.f32.mxu0 0.0
  %1739 = vmatmul.mubr.f32.gmra.mrb[0].mxu0 %v1577
  %v1740 = vpop.f32.mrb[0].mxu0
  %v1741 = vadd.f32 %v1656, %v1740
  %v1742 = vpop.f32.mrb[0].mxu0
  %1743 = vmatprep.mubr.f32.mxu0 0.0
  %1744 = vmatmul.mubr.f32.gmra.mrb[0].mxu0 %v1578
  %v1745 = vpop.f32.mrb[0].mxu0
  %v1746 = vadd.f32 %v1661, %v1745
  %v1747 = vpop.f32.mrb[0].mxu0
  %1748 = vdwg.mxu0
  %v1749 = vadd.f32 %v1731, %v1736
  %v1750 = vadd.f32 %v1749, %v1741
  %v1751 = vadd.f32 %v1750, %v1746
  %v1752 = vrot.slane %v1751, 4
  %v1753 = vadd.f32 %v1751, %v1752
  %v1754 = vrot.slane %v1753, 2
  %v1755 = vadd.f32 %v1753, %v1754
  %v1756 = vrot.slane %v1755, 1
  %v1757 = vadd.f32 %v1755, %v1756
  %v1758 = vmul.f32 %v1731, %v1731
  %v1759 = vmul.f32 %v1736, %v1736
  %v1760 = vmul.f32 %v1741, %v1741
  %v1761 = vmul.f32 %v1746, %v1746
  %v1762 = vadd.f32 %v1758, %v1759
  %v1763 = vadd.f32 %v1762, %v1760
  %v1764 = vadd.f32 %v1763, %v1761
  %v1765 = vrot.slane %v1764, 4
  %v1766 = vadd.f32 %v1764, %v1765
  %v1767 = vrot.slane %v1766, 2
  %v1768 = vadd.f32 %v1766, %v1767
  %v1769 = vrot.slane %v1768, 1
  %v1770 = vadd.f32 %v1768, %v1769
  %v1771 = vmul.f32 %v1757, 0.03125
  %v1772 = vmul.f32 %v1770, 0.03125
  %v1773 = vmul.f32 %v1771, %v1771
  %v1774 = vsub.f32 %v1772, %v1773
  %v1775 = vmax.f32 %v1774, 0.0
  %v1776 = vadd.f32 %v1775, 1e-05
  %v1777 = vrsqrt.pop %v1776
  %v1778 = vmul.f32 %v152, %v1777
  %v1779 = vmul.f32 %v1771, %v1778
  %v1780 = vsub.f32 %v153, %v1779
  %v1782 = vlaneseq
  %v1783 = vshrl.u32 %v1782, 7
  %v1784 = vsub.s32 0, %v1783
  %v1785 = vrot.slane %v1778, %v1784
  %v1787 = vmul.f32 %v1731, %v1785
  %v1788 = vmul.f32 %v1736, %v1785
  %v1789 = vmul.f32 %v1741, %v1785
  %v1790 = vmul.f32 %v1746, %v1785
  %v1792 = vlaneseq
  %v1793 = vshrl.u32 %v1792, 7
  %v1794 = vsub.s32 0, %v1793
  %v1795 = vrot.slane %v1780, %v1794
  %v1797 = vadd.f32 %v1787, %v1795
  %v1798 = vadd.f32 %v1788, %v1795
  %v1799 = vadd.f32 %v1789, %v1795
  %v1800 = vadd.f32 %v1790, %v1795
  %v1801 = vmax.f32 %v1797, 0.0
  %v1802 = vmax.f32 %v1798, 0.0
  %v1803 = vmax.f32 %v1799, 0.0
  %v1804 = vmax.f32 %v1800, 0.0
  %v1805 = vrot.slane %v1801, 7
  %v1806 = vrot.slane %v1802, 7
  %v1807 = vrot.slane %v1803, 7
  %v1808 = vrot.slane %v1804, 7
  %v1809 = vsel %vm221, %v1807, %v1808
  %v1810 = vsel %vm221, %v1806, %v1807
  %v1811 = vsel %vm221, %v1805, %v1806
  %v1812 = vsel %vm221, %v1808, %v1805
  %v1813 = vsel %vm230, %v1812, 0.0
  %v1814 = vsel %vm231, %v1811, 0.0
  %v1815 = vsel %vm232, %v1810, 0.0
  %v1816 = vsel %vm233, %v1809, 0.0
  %v1817 = vrot.slane %v1801, 1
  %v1818 = vrot.slane %v1802, 1
  %v1819 = vrot.slane %v1803, 1
  %v1820 = vrot.slane %v1804, 1
  %v1821 = vsel %vm242, %v1819, %v1820
  %v1822 = vsel %vm242, %v1818, %v1819
  %v1823 = vsel %vm242, %v1817, %v1818
  %v1824 = vsel %vm242, %v1820, %v1817
  %v1825 = vsel %vm251, %v1823, 0.0
  %v1826 = vsel %vm252, %v1822, 0.0
  %v1827 = vsel %vm253, %v1821, 0.0
  %v1828 = vsel %vm254, %v1824, 0.0
  %1829 = vmatprep.subr.mxu0 0.0
  %1830 = vmatpush1.msra.mxu0 %v99
  %1831 = vmatprep.subr.mxu0 0.0
  %1832 = vmatpush1.msra.mxu0 %v100
  %1833 = vmatprep.subr.mxu0 0.0
  %1834 = vmatpush1.msra.mxu0 %v101
  %1835 = vmatprep.subr.mxu0 0.0
  %1836 = vmatpush1.msra.mxu0 %v102
  %1837 = vmatprep.subr.mxu0 0.0
  %1838 = vmatpush1.msra.mxu0 %v103
  %1839 = vmatprep.subr.mxu0 0.0
  %1840 = vmatpush1.msra.mxu0 %v104
  %1841 = vmatprep.subr.mxu0 0.0
  %1842 = vmatpush1.msra.mxu0 %v105
  %1843 = vmatprep.subr.mxu0 0.0
  %1844 = vmatpush1.msra.mxu0 %v106
  %1845 = vmatprep.subr.mxu0 0.0
  %1846 = vmatpush1.msra.mxu0 %v107
  %1847 = vmatprep.subr.mxu0 0.0
  %1848 = vmatpush1.msra.mxu0 %v108
  %1849 = vmatprep.subr.mxu0 0.0
  %1850 = vmatpush1.msra.mxu0 %v109
  %1851 = vmatprep.subr.mxu0 0.0
  %1852 = vmatpush1.msra.mxu0 %v110
  %1853 = vmatprep.subr.mxu0 0.0
  %1854 = vmatpush1.msra.mxu0 %v111
  %1855 = vmatprep.subr.mxu0 0.0
  %1856 = vmatpush1.msra.mxu0 %v112
  %1857 = vmatprep.subr.mxu0 0.0
  %1858 = vmatpush1.msra.mxu0 %v113
  %1859 = vmatprep.subr.mxu0 0.0
  %1860 = vmatpush1.msra.mxu0 %v114
  %1861 = vmatprep.subr.mxu0 0.0
  %1862 = vmatpush1.msra.mxu0 %v115
  %1863 = vmatprep.subr.mxu0 0.0
  %1864 = vmatpush1.msra.mxu0 %v116
  %1865 = vmatprep.subr.mxu0 0.0
  %1866 = vmatpush1.msra.mxu0 %v117
  %1867 = vmatprep.subr.mxu0 0.0
  %1868 = vmatpush1.msra.mxu0 %v118
  %1869 = vmatprep.subr.mxu0 0.0
  %1870 = vmatpush1.msra.mxu0 %v119
  %1871 = vmatprep.subr.mxu0 0.0
  %1872 = vmatpush1.msra.mxu0 %v120
  %1873 = vmatprep.subr.mxu0 0.0
  %1874 = vmatpush1.msra.mxu0 %v121
  %1875 = vmatprep.subr.mxu0 0.0
  %1876 = vmatpush1.msra.mxu0 %v122
  %1877 = vmatprep.subr.mxu0 0.0
  %1878 = vmatpush1.msra.mxu0 %v123
  %1879 = vmatprep.subr.mxu0 0.0
  %1880 = vmatpush1.msra.mxu0 %v124
  %1881 = vmatprep.subr.mxu0 0.0
  %1882 = vmatpush1.msra.mxu0 %v125
  %1883 = vmatprep.subr.mxu0 0.0
  %1884 = vmatpush1.msra.mxu0 %v126
  %1885 = vmatprep.subr.mxu0 0.0
  %1886 = vmatpush1.msra.mxu0 %v127
  %1887 = vmatprep.subr.mxu0 0.0
  %1888 = vmatpush1.msra.mxu0 %v128
  %1889 = vmatprep.subr.mxu0 0.0
  %1890 = vmatpush1.msra.mxu0 %v129
  %1891 = vmatprep.subr.mxu0 0.0
  %1892 = vmatpush1.msra.mxu0 %v130
  %1893 = vmatprep.mubr.f32.mxu0 %v1801
  %1894 = vmatmul.mubr.f32.gmra.mrb[0].mxu0 %v1813
  %v1895 = vpop.f32.mrb[0].mxu0
  %v1896 = vadd.f32 %v905, %v1895
  %v1897 = vpop.f32.mrb[0].mxu0
  %1898 = vmatprep.mubr.f32.mxu0 %v1802
  %1899 = vmatmul.mubr.f32.gmra.mrb[0].mxu0 %v1814
  %v1900 = vpop.f32.mrb[0].mxu0
  %v1901 = vadd.f32 %v905, %v1900
  %v1902 = vpop.f32.mrb[0].mxu0
  %1903 = vmatprep.mubr.f32.mxu0 %v1803
  %1904 = vmatmul.mubr.f32.gmra.mrb[0].mxu0 %v1815
  %v1905 = vpop.f32.mrb[0].mxu0
  %v1906 = vadd.f32 %v905, %v1905
  %v1907 = vpop.f32.mrb[0].mxu0
  %1908 = vmatprep.mubr.f32.mxu0 %v1804
  %1909 = vmatmul.mubr.f32.gmra.mrb[0].mxu0 %v1816
  %v1910 = vpop.f32.mrb[0].mxu0
  %v1911 = vadd.f32 %v905, %v1910
  %v1912 = vpop.f32.mrb[0].mxu0
  %1913 = vdwg.mxu0
  %1914 = vmatprep.subr.mxu0 0.0
  %1915 = vmatpush1.msra.mxu0 %v131
  %1916 = vmatprep.subr.mxu0 0.0
  %1917 = vmatpush1.msra.mxu0 %v132
  %1918 = vmatprep.subr.mxu0 0.0
  %1919 = vmatpush1.msra.mxu0 %v133
  %1920 = vmatprep.subr.mxu0 0.0
  %1921 = vmatpush1.msra.mxu0 %v134
  %1922 = vmatprep.subr.mxu0 0.0
  %1923 = vmatpush1.msra.mxu0 %v135
  %1924 = vmatprep.subr.mxu0 0.0
  %1925 = vmatpush1.msra.mxu0 %v136
  %1926 = vmatprep.subr.mxu0 0.0
  %1927 = vmatpush1.msra.mxu0 %v137
  %1928 = vmatprep.subr.mxu0 0.0
  %1929 = vmatpush1.msra.mxu0 %v138
  %1930 = vmatprep.subr.mxu0 0.0
  %1931 = vmatpush1.msra.mxu0 %v139
  %1932 = vmatprep.subr.mxu0 0.0
  %1933 = vmatpush1.msra.mxu0 %v140
  %1934 = vmatprep.subr.mxu0 0.0
  %1935 = vmatpush1.msra.mxu0 %v141
  %1936 = vmatprep.subr.mxu0 0.0
  %1937 = vmatpush1.msra.mxu0 %v142
  %1938 = vmatprep.subr.mxu0 0.0
  %1939 = vmatpush1.msra.mxu0 %v143
  %1940 = vmatprep.subr.mxu0 0.0
  %1941 = vmatpush1.msra.mxu0 %v144
  %1942 = vmatprep.subr.mxu0 0.0
  %1943 = vmatpush1.msra.mxu0 %v145
  %1944 = vmatprep.subr.mxu0 0.0
  %1945 = vmatpush1.msra.mxu0 %v146
  %1946 = vmatprep.subr.mxu0 0.0
  %1947 = vmatpush1.msra.mxu0 0.0
  %1948 = vmatprep.subr.mxu0 0.0
  %1949 = vmatpush1.msra.mxu0 0.0
  %1950 = vmatprep.subr.mxu0 0.0
  %1951 = vmatpush1.msra.mxu0 0.0
  %1952 = vmatprep.subr.mxu0 0.0
  %1953 = vmatpush1.msra.mxu0 0.0
  %1954 = vmatprep.subr.mxu0 0.0
  %1955 = vmatpush1.msra.mxu0 0.0
  %1956 = vmatprep.subr.mxu0 0.0
  %1957 = vmatpush1.msra.mxu0 0.0
  %1958 = vmatprep.subr.mxu0 0.0
  %1959 = vmatpush1.msra.mxu0 0.0
  %1960 = vmatprep.subr.mxu0 0.0
  %1961 = vmatpush1.msra.mxu0 0.0
  %1962 = vmatprep.subr.mxu0 0.0
  %1963 = vmatpush1.msra.mxu0 0.0
  %1964 = vmatprep.subr.mxu0 0.0
  %1965 = vmatpush1.msra.mxu0 0.0
  %1966 = vmatprep.subr.mxu0 0.0
  %1967 = vmatpush1.msra.mxu0 0.0
  %1968 = vmatprep.subr.mxu0 0.0
  %1969 = vmatpush1.msra.mxu0 0.0
  %1970 = vmatprep.subr.mxu0 0.0
  %1971 = vmatpush1.msra.mxu0 0.0
  %1972 = vmatprep.subr.mxu0 0.0
  %1973 = vmatpush1.msra.mxu0 0.0
  %1974 = vmatprep.subr.mxu0 0.0
  %1975 = vmatpush1.msra.mxu0 0.0
  %1976 = vmatprep.subr.mxu0 0.0
  %1977 = vmatpush1.msra.mxu0 0.0
  %1978 = vmatprep.mubr.f32.mxu0 0.0
  %1979 = vmatmul.mubr.f32.gmra.mrb[0].mxu0 %v1825
  %v1980 = vpop.f32.mrb[0].mxu0
  %v1981 = vadd.f32 %v1896, %v1980
  %v1982 = vpop.f32.mrb[0].mxu0
  %1983 = vmatprep.mubr.f32.mxu0 0.0
  %1984 = vmatmul.mubr.f32.gmra.mrb[0].mxu0 %v1826
  %v1985 = vpop.f32.mrb[0].mxu0
  %v1986 = vadd.f32 %v1901, %v1985
  %v1987 = vpop.f32.mrb[0].mxu0
  %1988 = vmatprep.mubr.f32.mxu0 0.0
  %1989 = vmatmul.mubr.f32.gmra.mrb[0].mxu0 %v1827
  %v1990 = vpop.f32.mrb[0].mxu0
  %v1991 = vadd.f32 %v1906, %v1990
  %v1992 = vpop.f32.mrb[0].mxu0
  %1993 = vmatprep.mubr.f32.mxu0 0.0
  %1994 = vmatmul.mubr.f32.gmra.mrb[0].mxu0 %v1828
  %v1995 = vpop.f32.mrb[0].mxu0
  %v1996 = vadd.f32 %v1911, %v1995
  %v1997 = vpop.f32.mrb[0].mxu0
  %1998 = vdwg.mxu0
  %1999 = vmatprep.subr.mxu0 0.0
  %2000 = vmatpush1.msra.mxu0 %v147
  %2001 = vmatprep.subr.mxu0 0.0
  %2002 = vmatpush1.msra.mxu0 0.0
  %2003 = vmatprep.subr.mxu0 0.0
  %2004 = vmatpush1.msra.mxu0 0.0
  %2005 = vmatprep.subr.mxu0 0.0
  %2006 = vmatpush1.msra.mxu0 0.0
  %2007 = vmatprep.subr.mxu0 0.0
  %2008 = vmatpush1.msra.mxu0 0.0
  %2009 = vmatprep.subr.mxu0 0.0
  %2010 = vmatpush1.msra.mxu0 0.0
  %2011 = vmatprep.subr.mxu0 0.0
  %2012 = vmatpush1.msra.mxu0 0.0
  %2013 = vmatprep.subr.mxu0 0.0
  %2014 = vmatpush1.msra.mxu0 0.0
  %2015 = vmatprep.subr.mxu0 0.0
  %2016 = vmatpush1.msra.mxu0 0.0
  %2017 = vmatprep.subr.mxu0 0.0
  %2018 = vmatpush1.msra.mxu0 0.0
  %2019 = vmatprep.subr.mxu0 0.0
  %2020 = vmatpush1.msra.mxu0 0.0
  %2021 = vmatprep.subr.mxu0 0.0
  %2022 = vmatpush1.msra.mxu0 0.0
  %2023 = vmatprep.subr.mxu0 0.0
  %2024 = vmatpush1.msra.mxu0 0.0
  %2025 = vmatprep.subr.mxu0 0.0
  %2026 = vmatpush1.msra.mxu0 0.0
  %2027 = vmatprep.subr.mxu0 0.0
  %2028 = vmatpush1.msra.mxu0 0.0
  %2029 = vmatprep.subr.mxu0 0.0
  %2030 = vmatpush1.msra.mxu0 0.0
  %2031 = vmatprep.subr.mxu0 0.0
  %2032 = vmatpush1.msra.mxu0 0.0
  %2033 = vmatprep.subr.mxu0 0.0
  %2034 = vmatpush1.msra.mxu0 0.0
  %2035 = vmatprep.subr.mxu0 0.0
  %2036 = vmatpush1.msra.mxu0 0.0
  %2037 = vmatprep.subr.mxu0 0.0
  %2038 = vmatpush1.msra.mxu0 0.0
  %2039 = vmatprep.subr.mxu0 0.0
  %2040 = vmatpush1.msra.mxu0 0.0
  %2041 = vmatprep.subr.mxu0 0.0
  %2042 = vmatpush1.msra.mxu0 0.0
  %2043 = vmatprep.subr.mxu0 0.0
  %2044 = vmatpush1.msra.mxu0 0.0
  %2045 = vmatprep.subr.mxu0 0.0
  %2046 = vmatpush1.msra.mxu0 0.0
  %2047 = vmatprep.subr.mxu0 0.0
  %2048 = vmatpush1.msra.mxu0 0.0
  %2049 = vmatprep.subr.mxu0 0.0
  %2050 = vmatpush1.msra.mxu0 0.0
  %2051 = vmatprep.subr.mxu0 0.0
  %2052 = vmatpush1.msra.mxu0 0.0
  %2053 = vmatprep.subr.mxu0 0.0
  %2054 = vmatpush1.msra.mxu0 0.0
  %2055 = vmatprep.subr.mxu0 0.0
  %2056 = vmatpush1.msra.mxu0 0.0
  %2057 = vmatprep.subr.mxu0 0.0
  %2058 = vmatpush1.msra.mxu0 0.0
  %2059 = vmatprep.subr.mxu0 0.0
  %2060 = vmatpush1.msra.mxu0 0.0
  %2061 = vmatprep.subr.mxu0 0.0
  %2062 = vmatpush1.msra.mxu0 0.0
  %2063 = vmatprep.mubr.f32.mxu0 0.0
  %2064 = vmatmul.mubr.f32.gmra.mrb[0].mxu0 %v1201
  %v2065 = vpop.f32.mrb[0].mxu0
  %v2066 = vadd.f32 %v1081, %v2065
  %v2067 = vpop.f32.mrb[0].mxu0
  %2068 = vmatprep.mubr.f32.mxu0 0.0
  %2069 = vmatmul.mubr.f32.gmra.mrb[0].mxu0 %v1204
  %v2070 = vpop.f32.mrb[0].mxu0
  %v2071 = vadd.f32 %v1081, %v2070
  %v2072 = vpop.f32.mrb[0].mxu0
  %2073 = vmatprep.mubr.f32.mxu0 0.0
  %2074 = vmatmul.mubr.f32.gmra.mrb[0].mxu0 %v1207
  %v2075 = vpop.f32.mrb[0].mxu0
  %v2076 = vadd.f32 %v1081, %v2075
  %v2077 = vpop.f32.mrb[0].mxu0
  %2078 = vmatprep.mubr.f32.mxu0 0.0
  %2079 = vmatmul.mubr.f32.gmra.mrb[0].mxu0 %v1210
  %v2080 = vpop.f32.mrb[0].mxu0
  %v2081 = vadd.f32 %v1081, %v2080
  %v2082 = vpop.f32.mrb[0].mxu0
  %2083 = vdwg.mxu0
  %v2084 = vadd.f32 %v1172, %v2066
  %v2085 = vadd.f32 %v1173, %v2071
  %v2086 = vadd.f32 %v1174, %v2076
  %v2087 = vadd.f32 %v1175, %v2081
  %v2088 = vadd.f32 %v2084, %v1981
  %v2089 = vadd.f32 %v2085, %v1986
  %v2090 = vadd.f32 %v2086, %v1991
  %v2091 = vadd.f32 %v2087, %v1996
  %2092 = vst.msk [vmem:[%s13] sm:$0xff] %vm259, %v2088
  %2093 = vst.msk [vmem:[%s13 + $0x8] sm:$0xff] %vm259, %v2089
  %2094 = vst.msk [vmem:[%s13 + $0x10] sm:$0xff] %vm259, %v2090
  %2095 = vst.msk [vmem:[%s13 + $0x18] sm:$0xff] %vm259, %v2091
  // Predicated region
  $region54: #{tpu_custom_call.1} parent=0 // pred_check
    _
  $region55: #{tpu_custom_call.1} parent=0 // pred_check_branch
    %2097 = sbr.rel (0) target = $region57
  $region56: #{tpu_custom_call.1} parent=0 // pred_region
    _
  $region57: #{tpu_custom_call.1} parent=0 // pred_fallthru
    _
  // Predicated region
  $region58: #{tpu_custom_call.1} parent=0 // pred_check
    _
  $region59: #{tpu_custom_call.1} parent=0 // pred_check_branch
    %2099 = sbr.rel (0) target = $region61
  $region60: #{tpu_custom_call.1} parent=0 // pred_region
    _
  $region61: #{tpu_custom_call.1} parent=0 // pred_fallthru
    _

</llo_original>
